<compile_context>
chip_gen: v7x
topology: tpu7x:2x2x1
jax: 0.10.0
libtpu: 0.0.40
codegen_flags: <defaults>
</compile_context>

<pallas_src>
import numpy as np
import jax
import jax.numpy as jnp
from jax.experimental import pallas as pl
from jax.experimental.pallas import tpu as pltpu


def make_lstm_rul_kernel(n_layers, N, T, H):
    """Pallas kernel for LSTM_RUL.forward (eval mode, unidirectional).

    Input refs (all whole-array VMEM refs), in order:
      x2                   (T*N, D0p)   time-major rows (row t*N+n == x[n, t, :])
      per layer l:         wi_l (D_l, 4H) [= W_ih^T, layer-0 zero-padded],
                           wh_l (H, 4H)   [= W_hh^T],
                           b_l  (1, 4H)   [= b_ih + b_hh]
      regressor:           w1 (H, H), b1 (1, H), w2 (H, H//2), b2 (1, H//2),
                           w3 (H//2, 1), b3 (1, 1)
    Output refs:
      pred (N, 1), enc_dense (N, T*H)
    """

    def kernel(*refs):
        x_ref = refs[0]
        lrefs = refs[1:1 + 3 * n_layers]
        (w1_ref, b1_ref, w2_ref, b2_ref,
         w3_ref, b3_ref) = refs[1 + 3 * n_layers:1 + 3 * n_layers + 6]
        pred_ref, enc_ref = refs[-2:]

        layer_in = x_ref[...]                              # (T*N, D_0)
        outs = None
        for l in range(n_layers):
            wi = lrefs[3 * l + 0][...]                     # (D_l, 4H)
            wh = lrefs[3 * l + 1][...]                     # (H, 4H)
            b = lrefs[3 * l + 2][...]                      # (1, 4H)

            # cuDNN-style: all timesteps' input projections in one GEMM, bias
            # folded in once — both are off the serial recurrence path.
            xproj = (jnp.dot(layer_in, wi,
                             preferred_element_type=jnp.float32) + b)  # (T*N,4H)

            h = jnp.zeros((N, H), jnp.float32)
            c = jnp.zeros((N, H), jnp.float32)
            outs = []
            for t in range(T):                             # static unroll (T=8)
                g = (xproj[t * N:(t + 1) * N, :]
                     + jnp.dot(h, wh, preferred_element_type=jnp.float32))
                # Two full-width (N, 4H) EUP ops instead of four narrow slices.
                sig = jax.nn.sigmoid(g)
                tnh = jnp.tanh(g)
                i_g = sig[:, 0 * H:1 * H]
                f_g = sig[:, 1 * H:2 * H]
                g_g = tnh[:, 2 * H:3 * H]
                o_g = sig[:, 3 * H:4 * H]
                c = f_g * c + i_g * g_g
                h = o_g * jnp.tanh(c)
                outs.append(h)

            # Next layer's batched input-GEMM operand, still time-major.
            # TODO(synk): inter-layer LSTM dropout is identity (eval mode).
            layer_in = jnp.concatenate(outs, axis=0)       # (T*N, H)

        # Single lane-dense (N, T*H) store; no per-step masked stores.
        enc_ref[...] = jnp.concatenate(outs, axis=1)

        # features = encoder_outputs[:, -1:, :] == last timestep hidden state.
        feat = outs[-1]                                    # (N, H)

        # Regressor (Dropout = identity in eval mode).
        h1 = jnp.maximum(
            jnp.dot(feat, w1_ref[...], preferred_element_type=jnp.float32)
            + b1_ref[...], 0.0)
        h2 = jnp.maximum(
            jnp.dot(h1, w2_ref[...], preferred_element_type=jnp.float32)
            + b2_ref[...], 0.0)
        pred_ref[...] = (
            jnp.dot(h2, w3_ref[...], preferred_element_type=jnp.float32)
            + b3_ref[...])

    return kernel


def build_params(key, input_dim, hidden_dim, n_layers):
    """PyTorch-style parameter init (uniform(-1/sqrt(fan), 1/sqrt(fan)))."""
    H = hidden_dim
    keys = jax.random.split(key, 4 * n_layers + 6)

    def u(k, shape, bound):
        return jax.random.uniform(k, shape, jnp.float32, -bound, bound)

    idx = 0
    layers = []
    kb = 1.0 / np.sqrt(H)
    for l in range(n_layers):
        D = input_dim if l == 0 else H
        w_ih = u(keys[idx], (4 * H, D), kb); idx += 1
        w_hh = u(keys[idx], (4 * H, H), kb); idx += 1
        b_ih = u(keys[idx], (4 * H,), kb); idx += 1
        b_hh = u(keys[idx], (4 * H,), kb); idx += 1
        layers.append({"w_ih": w_ih, "w_hh": w_hh, "b_ih": b_ih, "b_hh": b_hh})

    reg = {
        "w1": u(keys[idx + 0], (H, H), 1.0 / np.sqrt(H)),
        "b1": u(keys[idx + 1], (H,), 1.0 / np.sqrt(H)),
        "w2": u(keys[idx + 2], (H // 2, H), 1.0 / np.sqrt(H)),
        "b2": u(keys[idx + 3], (H // 2,), 1.0 / np.sqrt(H)),
        "w3": u(keys[idx + 4], (1, H // 2), 1.0 / np.sqrt(H // 2)),
        "b3": u(keys[idx + 5], (1,), 1.0 / np.sqrt(H // 2)),
    }
    return {"layers": layers, "reg": reg}


def pack_params(params, n_layers, input_dim):
    """One-time host-side packing (hoisted out of the per-call path)."""
    d0_pad = ((input_dim + 7) // 8) * 8           # 14 -> 16 (sublane aligned)
    packed = []
    for l in range(n_layers):
        p = params["layers"][l]
        wi = jnp.asarray(p["w_ih"]).T                                 # (D_l, 4H)
        if l == 0 and wi.shape[0] != d0_pad:
            wi = jnp.pad(wi, ((0, d0_pad - wi.shape[0]), (0, 0)))     # zero rows
        packed.append(wi)
        packed.append(jnp.asarray(p["w_hh"]).T)                       # (H, 4H)
        packed.append((p["b_ih"] + p["b_hh"]).reshape(1, -1))         # (1, 4H)
    r = params["reg"]
    packed += [
        jnp.asarray(r["w1"]).T, r["b1"].reshape(1, -1),
        jnp.asarray(r["w2"]).T, r["b2"].reshape(1, -1),
        jnp.asarray(r["w3"]).T, r["b3"].reshape(1, -1),
    ]
    return packed, d0_pad


def lstm_rul_forward(x, packed, n_layers, hidden_dim, d0_pad):
    N, T, D = x.shape
    H = hidden_dim

    # Layout plumbing (pad to 16 features, time-major rows) — one XLA op chain,
    # not compute hoisting.
    x_p = jnp.pad(x, ((0, 0), (0, 0), (0, d0_pad - D)))
    x2 = jnp.transpose(x_p, (1, 0, 2)).reshape(T * N, d0_pad)

    inputs = [x2] + list(packed)
    kernel = make_lstm_rul_kernel(n_layers, N, T, H)
    vmem = pltpu.MemorySpace.VMEM

    pred, enc_dense = pl.pallas_call(
        kernel,
        # Grid-less single-shot kernel: whole arrays resident in VMEM, no
        # pipelining / double-buffering machinery.
        in_specs=[pl.BlockSpec(memory_space=vmem) for _ in inputs],
        out_specs=(pl.BlockSpec(memory_space=vmem),
                   pl.BlockSpec(memory_space=vmem)),
        out_shape=(
            jax.ShapeDtypeStruct((N, 1), jnp.float32),
            jax.ShapeDtypeStruct((N, T * H), jnp.float32),
        ),
        compiler_params=pltpu.CompilerParams(
            vmem_limit_bytes=16 * 1024 * 1024,   # KB working set; v7x headroom
        ),
    )(*inputs)

    enc = enc_dense.reshape(N, T, H)
    feat = enc[:, -1, :]
    # matches PyTorch return: (predictions, features, encoder_outputs)
    return pred, feat, enc


def reference_forward(x, params, n_layers, hidden_dim):
    """Pure-JAX reference matching PyTorch LSTM_RUL.forward (eval, bid=False)."""
    H = hidden_dim
    N, T, _ = x.shape
    layer_in = x
    for l in range(n_layers):
        p = params["layers"][l]
        b = p["b_ih"] + p["b_hh"]
        h = jnp.zeros((N, H), jnp.float32)
        c = jnp.zeros((N, H), jnp.float32)
        outs = []
        for t in range(T):
            gates = layer_in[:, t, :] @ p["w_ih"].T + h @ p["w_hh"].T + b
            i = jax.nn.sigmoid(gates[:, :H])
            f = jax.nn.sigmoid(gates[:, H:2 * H])
            g = jnp.tanh(gates[:, 2 * H:3 * H])
            o = jax.nn.sigmoid(gates[:, 3 * H:])
            c = f * c + i * g
            h = o * jnp.tanh(c)
            outs.append(h)
        layer_in = jnp.stack(outs, axis=1)
    enc = layer_in
    feat = enc[:, -1, :]
    r = params["reg"]
    h1 = jnp.maximum(feat @ r["w1"].T + r["b1"], 0.0)
    h2 = jnp.maximum(h1 @ r["w2"].T + r["b2"], 0.0)
    pred = h2 @ r["w3"].T + r["b3"]
    return pred, feat, enc


if __name__ == "__main__":
    # input_dim=14 (sensor channels), seq len 8, hidden_dim=32, n_layers=2,
    # dropout eval-mode, bid=False, batch=2.
    N, T, D, H, n_layers = 2, 8, 14, 32, 2

    key = jax.random.PRNGKey(0)
    pkey, xkey = jax.random.split(key)
    params = build_params(pkey, D, H, n_layers)
    x = jax.random.normal(xkey, (N, T, D), jnp.float32)   # batch_first input

    packed, d0_pad = pack_params(params, n_layers, D)     # done once, reused
    pred, feat, enc = lstm_rul_forward(x, packed, n_layers, H, d0_pad)
    jax.block_until_ready((pred, feat, enc))

    pred_ref, feat_ref, enc_ref = reference_forward(x, params, n_layers, H)
    np.testing.assert_allclose(np.asarray(enc), np.asarray(enc_ref),
                               rtol=1e-3, atol=1e-3)
    np.testing.assert_allclose(np.asarray(feat), np.asarray(feat_ref),
                               rtol=1e-3, atol=1e-3)
    np.testing.assert_allclose(np.asarray(pred), np.asarray(pred_ref),
                               rtol=1e-3, atol=1e-3)

    print("KERNEL_OK")
</pallas_src>

<mosaic_0001>
module attributes {stable_mosaic.version = 11 : i64} {
  func.func @kernel(%arg0: memref<16x16xf32, #tpu.memory_space<vmem>>, %arg1: memref<16x128xf32, #tpu.memory_space<vmem>>, %arg2: memref<32x128xf32, #tpu.memory_space<vmem>>, %arg3: memref<1x128xf32, #tpu.memory_space<vmem>>, %arg4: memref<32x128xf32, #tpu.memory_space<vmem>>, %arg5: memref<32x128xf32, #tpu.memory_space<vmem>>, %arg6: memref<1x128xf32, #tpu.memory_space<vmem>>, %arg7: memref<32x32xf32, #tpu.memory_space<vmem>>, %arg8: memref<1x32xf32, #tpu.memory_space<vmem>>, %arg9: memref<32x16xf32, #tpu.memory_space<vmem>>, %arg10: memref<1x16xf32, #tpu.memory_space<vmem>>, %arg11: memref<16x1xf32, #tpu.memory_space<vmem>>, %arg12: memref<1x1xf32, #tpu.memory_space<vmem>>, %arg13: memref<2x1xf32, #tpu.memory_space<vmem>>, %arg14: memref<2x256xf32, #tpu.memory_space<vmem>>) attributes {dimension_semantics = [], scalar_prefetch = 0 : i64, scratch_operands = 0 : i64, tpu.core_type = #tpu.core_type<tc>} {
    %c0 = arith.constant 0 : index
    %c0_0 = arith.constant 0 : index
    %0 = vector.load %arg0[%c0, %c0_0] : memref<16x16xf32, #tpu.memory_space<vmem>>, vector<16x16xf32>
    %c0_1 = arith.constant 0 : index
    %c0_2 = arith.constant 0 : index
    %1 = vector.load %arg1[%c0_1, %c0_2] : memref<16x128xf32, #tpu.memory_space<vmem>>, vector<16x128xf32>
    %c0_3 = arith.constant 0 : index
    %c0_4 = arith.constant 0 : index
    %2 = vector.load %arg2[%c0_3, %c0_4] : memref<32x128xf32, #tpu.memory_space<vmem>>, vector<32x128xf32>
    %c0_5 = arith.constant 0 : index
    %c0_6 = arith.constant 0 : index
    %3 = vector.load %arg3[%c0_5, %c0_6] : memref<1x128xf32, #tpu.memory_space<vmem>>, vector<1x128xf32>
    %cst = arith.constant dense<0.000000e+00> : vector<16x128xf32>
    %4 = tpu.matmul %0, %1, %cst {dimension_numbers = #tpu.dot_dimension_numbers<[1], [0], [0], [1], [0, 0, 1, 1], [], []>} : vector<16x16xf32>, vector<16x128xf32>, vector<16x128xf32> -> vector<16x128xf32>
    %5 = vector.broadcast %3 : vector<1x128xf32> to vector<16x128xf32>
    %6 = arith.addf %4, %5 : vector<16x128xf32>
    %cst_7 = arith.constant 0.000000e+00 : f32
    %7 = vector.broadcast %cst_7 : f32 to vector<2x32xf32>
    %cst_8 = arith.constant 0.000000e+00 : f32
    %8 = vector.broadcast %cst_8 : f32 to vector<2x32xf32>
    %9 = vector.extract_strided_slice %6 {offsets = [0, 0], sizes = [2, 128], strides = [1, 1]} : vector<16x128xf32> to vector<2x128xf32>
    %cst_9 = arith.constant dense<0.000000e+00> : vector<2x128xf32>
    %10 = tpu.matmul %7, %2, %cst_9 {dimension_numbers = #tpu.dot_dimension_numbers<[1], [0], [0], [1], [0, 0, 1, 1], [], []>} : vector<2x32xf32>, vector<32x128xf32>, vector<2x128xf32> -> vector<2x128xf32>
    %11 = arith.addf %9, %10 : vector<2x128xf32>
    %12 = arith.negf %11 : vector<2x128xf32>
    %13 = math.exp %12 : vector<2x128xf32>
    %cst_10 = arith.constant 1.000000e+00 : f32
    %14 = vector.broadcast %cst_10 : f32 to vector<2x128xf32>
    %15 = arith.addf %14, %13 : vector<2x128xf32>
    %16 = arith.divf %14, %15 : vector<2x128xf32>
    %17 = math.tanh %11 : vector<2x128xf32>
    %18 = vector.extract_strided_slice %16 {offsets = [0, 0], sizes = [2, 32], strides = [1, 1]} : vector<2x128xf32> to vector<2x32xf32>
    %19 = vector.extract_strided_slice %16 {offsets = [0, 32], sizes = [2, 32], strides = [1, 1]} : vector<2x128xf32> to vector<2x32xf32>
    %20 = vector.extract_strided_slice %17 {offsets = [0, 64], sizes = [2, 32], strides = [1, 1]} : vector<2x128xf32> to vector<2x32xf32>
    %21 = vector.extract_strided_slice %16 {offsets = [0, 96], sizes = [2, 32], strides = [1, 1]} : vector<2x128xf32> to vector<2x32xf32>
    %22 = arith.mulf %19, %8 : vector<2x32xf32>
    %23 = arith.mulf %18, %20 : vector<2x32xf32>
    %24 = arith.addf %22, %23 : vector<2x32xf32>
    %25 = math.tanh %24 : vector<2x32xf32>
    %26 = arith.mulf %21, %25 : vector<2x32xf32>
    %27 = vector.extract_strided_slice %6 {offsets = [2, 0], sizes = [2, 128], strides = [1, 1]} : vector<16x128xf32> to vector<2x128xf32>
    %cst_11 = arith.constant dense<0.000000e+00> : vector<2x128xf32>
    %28 = tpu.matmul %26, %2, %cst_11 {dimension_numbers = #tpu.dot_dimension_numbers<[1], [0], [0], [1], [0, 0, 1, 1], [], []>} : vector<2x32xf32>, vector<32x128xf32>, vector<2x128xf32> -> vector<2x128xf32>
    %29 = arith.addf %27, %28 : vector<2x128xf32>
    %30 = arith.negf %29 : vector<2x128xf32>
    %31 = math.exp %30 : vector<2x128xf32>
    %cst_12 = arith.constant 1.000000e+00 : f32
    %32 = vector.broadcast %cst_12 : f32 to vector<2x128xf32>
    %33 = arith.addf %32, %31 : vector<2x128xf32>
    %34 = arith.divf %32, %33 : vector<2x128xf32>
    %35 = math.tanh %29 : vector<2x128xf32>
    %36 = vector.extract_strided_slice %34 {offsets = [0, 0], sizes = [2, 32], strides = [1, 1]} : vector<2x128xf32> to vector<2x32xf32>
    %37 = vector.extract_strided_slice %34 {offsets = [0, 32], sizes = [2, 32], strides = [1, 1]} : vector<2x128xf32> to vector<2x32xf32>
    %38 = vector.extract_strided_slice %35 {offsets = [0, 64], sizes = [2, 32], strides = [1, 1]} : vector<2x128xf32> to vector<2x32xf32>
    %39 = vector.extract_strided_slice %34 {offsets = [0, 96], sizes = [2, 32], strides = [1, 1]} : vector<2x128xf32> to vector<2x32xf32>
    %40 = arith.mulf %37, %24 : vector<2x32xf32>
    %41 = arith.mulf %36, %38 : vector<2x32xf32>
    %42 = arith.addf %40, %41 : vector<2x32xf32>
    %43 = math.tanh %42 : vector<2x32xf32>
    %44 = arith.mulf %39, %43 : vector<2x32xf32>
    %45 = vector.extract_strided_slice %6 {offsets = [4, 0], sizes = [2, 128], strides = [1, 1]} : vector<16x128xf32> to vector<2x128xf32>
    %cst_13 = arith.constant dense<0.000000e+00> : vector<2x128xf32>
    %46 = tpu.matmul %44, %2, %cst_13 {dimension_numbers = #tpu.dot_dimension_numbers<[1], [0], [0], [1], [0, 0, 1, 1], [], []>} : vector<2x32xf32>, vector<32x128xf32>, vector<2x128xf32> -> vector<2x128xf32>
    %47 = arith.addf %45, %46 : vector<2x128xf32>
    %48 = arith.negf %47 : vector<2x128xf32>
    %49 = math.exp %48 : vector<2x128xf32>
    %cst_14 = arith.constant 1.000000e+00 : f32
    %50 = vector.broadcast %cst_14 : f32 to vector<2x128xf32>
    %51 = arith.addf %50, %49 : vector<2x128xf32>
    %52 = arith.divf %50, %51 : vector<2x128xf32>
    %53 = math.tanh %47 : vector<2x128xf32>
    %54 = vector.extract_strided_slice %52 {offsets = [0, 0], sizes = [2, 32], strides = [1, 1]} : vector<2x128xf32> to vector<2x32xf32>
    %55 = vector.extract_strided_slice %52 {offsets = [0, 32], sizes = [2, 32], strides = [1, 1]} : vector<2x128xf32> to vector<2x32xf32>
    %56 = vector.extract_strided_slice %53 {offsets = [0, 64], sizes = [2, 32], strides = [1, 1]} : vector<2x128xf32> to vector<2x32xf32>
    %57 = vector.extract_strided_slice %52 {offsets = [0, 96], sizes = [2, 32], strides = [1, 1]} : vector<2x128xf32> to vector<2x32xf32>
    %58 = arith.mulf %55, %42 : vector<2x32xf32>
    %59 = arith.mulf %54, %56 : vector<2x32xf32>
    %60 = arith.addf %58, %59 : vector<2x32xf32>
    %61 = math.tanh %60 : vector<2x32xf32>
    %62 = arith.mulf %57, %61 : vector<2x32xf32>
    %63 = vector.extract_strided_slice %6 {offsets = [6, 0], sizes = [2, 128], strides = [1, 1]} : vector<16x128xf32> to vector<2x128xf32>
    %cst_15 = arith.constant dense<0.000000e+00> : vector<2x128xf32>
    %64 = tpu.matmul %62, %2, %cst_15 {dimension_numbers = #tpu.dot_dimension_numbers<[1], [0], [0], [1], [0, 0, 1, 1], [], []>} : vector<2x32xf32>, vector<32x128xf32>, vector<2x128xf32> -> vector<2x128xf32>
    %65 = arith.addf %63, %64 : vector<2x128xf32>
    %66 = arith.negf %65 : vector<2x128xf32>
    %67 = math.exp %66 : vector<2x128xf32>
    %cst_16 = arith.constant 1.000000e+00 : f32
    %68 = vector.broadcast %cst_16 : f32 to vector<2x128xf32>
    %69 = arith.addf %68, %67 : vector<2x128xf32>
    %70 = arith.divf %68, %69 : vector<2x128xf32>
    %71 = math.tanh %65 : vector<2x128xf32>
    %72 = vector.extract_strided_slice %70 {offsets = [0, 0], sizes = [2, 32], strides = [1, 1]} : vector<2x128xf32> to vector<2x32xf32>
    %73 = vector.extract_strided_slice %70 {offsets = [0, 32], sizes = [2, 32], strides = [1, 1]} : vector<2x128xf32> to vector<2x32xf32>
    %74 = vector.extract_strided_slice %71 {offsets = [0, 64], sizes = [2, 32], strides = [1, 1]} : vector<2x128xf32> to vector<2x32xf32>
    %75 = vector.extract_strided_slice %70 {offsets = [0, 96], sizes = [2, 32], strides = [1, 1]} : vector<2x128xf32> to vector<2x32xf32>
    %76 = arith.mulf %73, %60 : vector<2x32xf32>
    %77 = arith.mulf %72, %74 : vector<2x32xf32>
    %78 = arith.addf %76, %77 : vector<2x32xf32>
    %79 = math.tanh %78 : vector<2x32xf32>
    %80 = arith.mulf %75, %79 : vector<2x32xf32>
    %81 = vector.extract_strided_slice %6 {offsets = [8, 0], sizes = [2, 128], strides = [1, 1]} : vector<16x128xf32> to vector<2x128xf32>
    %cst_17 = arith.constant dense<0.000000e+00> : vector<2x128xf32>
    %82 = tpu.matmul %80, %2, %cst_17 {dimension_numbers = #tpu.dot_dimension_numbers<[1], [0], [0], [1], [0, 0, 1, 1], [], []>} : vector<2x32xf32>, vector<32x128xf32>, vector<2x128xf32> -> vector<2x128xf32>
    %83 = arith.addf %81, %82 : vector<2x128xf32>
    %84 = arith.negf %83 : vector<2x128xf32>
    %85 = math.exp %84 : vector<2x128xf32>
    %cst_18 = arith.constant 1.000000e+00 : f32
    %86 = vector.broadcast %cst_18 : f32 to vector<2x128xf32>
    %87 = arith.addf %86, %85 : vector<2x128xf32>
    %88 = arith.divf %86, %87 : vector<2x128xf32>
    %89 = math.tanh %83 : vector<2x128xf32>
    %90 = vector.extract_strided_slice %88 {offsets = [0, 0], sizes = [2, 32], strides = [1, 1]} : vector<2x128xf32> to vector<2x32xf32>
    %91 = vector.extract_strided_slice %88 {offsets = [0, 32], sizes = [2, 32], strides = [1, 1]} : vector<2x128xf32> to vector<2x32xf32>
    %92 = vector.extract_strided_slice %89 {offsets = [0, 64], sizes = [2, 32], strides = [1, 1]} : vector<2x128xf32> to vector<2x32xf32>
    %93 = vector.extract_strided_slice %88 {offsets = [0, 96], sizes = [2, 32], strides = [1, 1]} : vector<2x128xf32> to vector<2x32xf32>
    %94 = arith.mulf %91, %78 : vector<2x32xf32>
    %95 = arith.mulf %90, %92 : vector<2x32xf32>
    %96 = arith.addf %94, %95 : vector<2x32xf32>
    %97 = math.tanh %96 : vector<2x32xf32>
    %98 = arith.mulf %93, %97 : vector<2x32xf32>
    %99 = vector.extract_strided_slice %6 {offsets = [10, 0], sizes = [2, 128], strides = [1, 1]} : vector<16x128xf32> to vector<2x128xf32>
    %cst_19 = arith.constant dense<0.000000e+00> : vector<2x128xf32>
    %100 = tpu.matmul %98, %2, %cst_19 {dimension_numbers = #tpu.dot_dimension_numbers<[1], [0], [0], [1], [0, 0, 1, 1], [], []>} : vector<2x32xf32>, vector<32x128xf32>, vector<2x128xf32> -> vector<2x128xf32>
    %101 = arith.addf %99, %100 : vector<2x128xf32>
    %102 = arith.negf %101 : vector<2x128xf32>
    %103 = math.exp %102 : vector<2x128xf32>
    %cst_20 = arith.constant 1.000000e+00 : f32
    %104 = vector.broadcast %cst_20 : f32 to vector<2x128xf32>
    %105 = arith.addf %104, %103 : vector<2x128xf32>
    %106 = arith.divf %104, %105 : vector<2x128xf32>
    %107 = math.tanh %101 : vector<2x128xf32>
    %108 = vector.extract_strided_slice %106 {offsets = [0, 0], sizes = [2, 32], strides = [1, 1]} : vector<2x128xf32> to vector<2x32xf32>
    %109 = vector.extract_strided_slice %106 {offsets = [0, 32], sizes = [2, 32], strides = [1, 1]} : vector<2x128xf32> to vector<2x32xf32>
    %110 = vector.extract_strided_slice %107 {offsets = [0, 64], sizes = [2, 32], strides = [1, 1]} : vector<2x128xf32> to vector<2x32xf32>
    %111 = vector.extract_strided_slice %106 {offsets = [0, 96], sizes = [2, 32], strides = [1, 1]} : vector<2x128xf32> to vector<2x32xf32>
    %112 = arith.mulf %109, %96 : vector<2x32xf32>
    %113 = arith.mulf %108, %110 : vector<2x32xf32>
    %114 = arith.addf %112, %113 : vector<2x32xf32>
    %115 = math.tanh %114 : vector<2x32xf32>
    %116 = arith.mulf %111, %115 : vector<2x32xf32>
    %117 = vector.extract_strided_slice %6 {offsets = [12, 0], sizes = [2, 128], strides = [1, 1]} : vector<16x128xf32> to vector<2x128xf32>
    %cst_21 = arith.constant dense<0.000000e+00> : vector<2x128xf32>
    %118 = tpu.matmul %116, %2, %cst_21 {dimension_numbers = #tpu.dot_dimension_numbers<[1], [0], [0], [1], [0, 0, 1, 1], [], []>} : vector<2x32xf32>, vector<32x128xf32>, vector<2x128xf32> -> vector<2x128xf32>
    %119 = arith.addf %117, %118 : vector<2x128xf32>
    %120 = arith.negf %119 : vector<2x128xf32>
    %121 = math.exp %120 : vector<2x128xf32>
    %cst_22 = arith.constant 1.000000e+00 : f32
    %122 = vector.broadcast %cst_22 : f32 to vector<2x128xf32>
    %123 = arith.addf %122, %121 : vector<2x128xf32>
    %124 = arith.divf %122, %123 : vector<2x128xf32>
    %125 = math.tanh %119 : vector<2x128xf32>
    %126 = vector.extract_strided_slice %124 {offsets = [0, 0], sizes = [2, 32], strides = [1, 1]} : vector<2x128xf32> to vector<2x32xf32>
    %127 = vector.extract_strided_slice %124 {offsets = [0, 32], sizes = [2, 32], strides = [1, 1]} : vector<2x128xf32> to vector<2x32xf32>
    %128 = vector.extract_strided_slice %125 {offsets = [0, 64], sizes = [2, 32], strides = [1, 1]} : vector<2x128xf32> to vector<2x32xf32>
    %129 = vector.extract_strided_slice %124 {offsets = [0, 96], sizes = [2, 32], strides = [1, 1]} : vector<2x128xf32> to vector<2x32xf32>
    %130 = arith.mulf %127, %114 : vector<2x32xf32>
    %131 = arith.mulf %126, %128 : vector<2x32xf32>
    %132 = arith.addf %130, %131 : vector<2x32xf32>
    %133 = math.tanh %132 : vector<2x32xf32>
    %134 = arith.mulf %129, %133 : vector<2x32xf32>
    %135 = vector.extract_strided_slice %6 {offsets = [14, 0], sizes = [2, 128], strides = [1, 1]} : vector<16x128xf32> to vector<2x128xf32>
    %cst_23 = arith.constant dense<0.000000e+00> : vector<2x128xf32>
    %136 = tpu.matmul %134, %2, %cst_23 {dimension_numbers = #tpu.dot_dimension_numbers<[1], [0], [0], [1], [0, 0, 1, 1], [], []>} : vector<2x32xf32>, vector<32x128xf32>, vector<2x128xf32> -> vector<2x128xf32>
    %137 = arith.addf %135, %136 : vector<2x128xf32>
    %138 = arith.negf %137 : vector<2x128xf32>
    %139 = math.exp %138 : vector<2x128xf32>
    %cst_24 = arith.constant 1.000000e+00 : f32
    %140 = vector.broadcast %cst_24 : f32 to vector<2x128xf32>
    %141 = arith.addf %140, %139 : vector<2x128xf32>
    %142 = arith.divf %140, %141 : vector<2x128xf32>
    %143 = math.tanh %137 : vector<2x128xf32>
    %144 = vector.extract_strided_slice %142 {offsets = [0, 0], sizes = [2, 32], strides = [1, 1]} : vector<2x128xf32> to vector<2x32xf32>
    %145 = vector.extract_strided_slice %142 {offsets = [0, 32], sizes = [2, 32], strides = [1, 1]} : vector<2x128xf32> to vector<2x32xf32>
    %146 = vector.extract_strided_slice %143 {offsets = [0, 64], sizes = [2, 32], strides = [1, 1]} : vector<2x128xf32> to vector<2x32xf32>
    %147 = vector.extract_strided_slice %142 {offsets = [0, 96], sizes = [2, 32], strides = [1, 1]} : vector<2x128xf32> to vector<2x32xf32>
    %148 = arith.mulf %145, %132 : vector<2x32xf32>
    %149 = arith.mulf %144, %146 : vector<2x32xf32>
    %150 = arith.addf %148, %149 : vector<2x32xf32>
    %151 = math.tanh %150 : vector<2x32xf32>
    %152 = arith.mulf %147, %151 : vector<2x32xf32>
    %153 = tpu.concatenate %26, %44, %62, %80, %98, %116, %134, %152 in 0 : vector<2x32xf32>, vector<2x32xf32>, vector<2x32xf32>, vector<2x32xf32>, vector<2x32xf32>, vector<2x32xf32>, vector<2x32xf32>, vector<2x32xf32> -> vector<16x32xf32>
    %c0_25 = arith.constant 0 : index
    %c0_26 = arith.constant 0 : index
    %154 = vector.load %arg4[%c0_25, %c0_26] : memref<32x128xf32, #tpu.memory_space<vmem>>, vector<32x128xf32>
    %c0_27 = arith.constant 0 : index
    %c0_28 = arith.constant 0 : index
    %155 = vector.load %arg5[%c0_27, %c0_28] : memref<32x128xf32, #tpu.memory_space<vmem>>, vector<32x128xf32>
    %c0_29 = arith.constant 0 : index
    %c0_30 = arith.constant 0 : index
    %156 = vector.load %arg6[%c0_29, %c0_30] : memref<1x128xf32, #tpu.memory_space<vmem>>, vector<1x128xf32>
    %cst_31 = arith.constant dense<0.000000e+00> : vector<16x128xf32>
    %157 = tpu.matmul %153, %154, %cst_31 {dimension_numbers = #tpu.dot_dimension_numbers<[1], [0], [0], [1], [0, 0, 1, 1], [], []>} : vector<16x32xf32>, vector<32x128xf32>, vector<16x128xf32> -> vector<16x128xf32>
    %158 = vector.broadcast %156 : vector<1x128xf32> to vector<16x128xf32>
    %159 = arith.addf %157, %158 : vector<16x128xf32>
    %cst_32 = arith.constant 0.000000e+00 : f32
    %160 = vector.broadcast %cst_32 : f32 to vector<2x32xf32>
    %cst_33 = arith.constant 0.000000e+00 : f32
    %161 = vector.broadcast %cst_33 : f32 to vector<2x32xf32>
    %162 = vector.extract_strided_slice %159 {offsets = [0, 0], sizes = [2, 128], strides = [1, 1]} : vector<16x128xf32> to vector<2x128xf32>
    %cst_34 = arith.constant dense<0.000000e+00> : vector<2x128xf32>
    %163 = tpu.matmul %160, %155, %cst_34 {dimension_numbers = #tpu.dot_dimension_numbers<[1], [0], [0], [1], [0, 0, 1, 1], [], []>} : vector<2x32xf32>, vector<32x128xf32>, vector<2x128xf32> -> vector<2x128xf32>
    %164 = arith.addf %162, %163 : vector<2x128xf32>
    %165 = arith.negf %164 : vector<2x128xf32>
    %166 = math.exp %165 : vector<2x128xf32>
    %cst_35 = arith.constant 1.000000e+00 : f32
    %167 = vector.broadcast %cst_35 : f32 to vector<2x128xf32>
    %168 = arith.addf %167, %166 : vector<2x128xf32>
    %169 = arith.divf %167, %168 : vector<2x128xf32>
    %170 = math.tanh %164 : vector<2x128xf32>
    %171 = vector.extract_strided_slice %169 {offsets = [0, 0], sizes = [2, 32], strides = [1, 1]} : vector<2x128xf32> to vector<2x32xf32>
    %172 = vector.extract_strided_slice %169 {offsets = [0, 32], sizes = [2, 32], strides = [1, 1]} : vector<2x128xf32> to vector<2x32xf32>
    %173 = vector.extract_strided_slice %170 {offsets = [0, 64], sizes = [2, 32], strides = [1, 1]} : vector<2x128xf32> to vector<2x32xf32>
    %174 = vector.extract_strided_slice %169 {offsets = [0, 96], sizes = [2, 32], strides = [1, 1]} : vector<2x128xf32> to vector<2x32xf32>
    %175 = arith.mulf %172, %161 : vector<2x32xf32>
    %176 = arith.mulf %171, %173 : vector<2x32xf32>
    %177 = arith.addf %175, %176 : vector<2x32xf32>
    %178 = math.tanh %177 : vector<2x32xf32>
    %179 = arith.mulf %174, %178 : vector<2x32xf32>
    %180 = vector.extract_strided_slice %159 {offsets = [2, 0], sizes = [2, 128], strides = [1, 1]} : vector<16x128xf32> to vector<2x128xf32>
    %cst_36 = arith.constant dense<0.000000e+00> : vector<2x128xf32>
    %181 = tpu.matmul %179, %155, %cst_36 {dimension_numbers = #tpu.dot_dimension_numbers<[1], [0], [0], [1], [0, 0, 1, 1], [], []>} : vector<2x32xf32>, vector<32x128xf32>, vector<2x128xf32> -> vector<2x128xf32>
    %182 = arith.addf %180, %181 : vector<2x128xf32>
    %183 = arith.negf %182 : vector<2x128xf32>
    %184 = math.exp %183 : vector<2x128xf32>
    %cst_37 = arith.constant 1.000000e+00 : f32
    %185 = vector.broadcast %cst_37 : f32 to vector<2x128xf32>
    %186 = arith.addf %185, %184 : vector<2x128xf32>
    %187 = arith.divf %185, %186 : vector<2x128xf32>
    %188 = math.tanh %182 : vector<2x128xf32>
    %189 = vector.extract_strided_slice %187 {offsets = [0, 0], sizes = [2, 32], strides = [1, 1]} : vector<2x128xf32> to vector<2x32xf32>
    %190 = vector.extract_strided_slice %187 {offsets = [0, 32], sizes = [2, 32], strides = [1, 1]} : vector<2x128xf32> to vector<2x32xf32>
    %191 = vector.extract_strided_slice %188 {offsets = [0, 64], sizes = [2, 32], strides = [1, 1]} : vector<2x128xf32> to vector<2x32xf32>
    %192 = vector.extract_strided_slice %187 {offsets = [0, 96], sizes = [2, 32], strides = [1, 1]} : vector<2x128xf32> to vector<2x32xf32>
    %193 = arith.mulf %190, %177 : vector<2x32xf32>
    %194 = arith.mulf %189, %191 : vector<2x32xf32>
    %195 = arith.addf %193, %194 : vector<2x32xf32>
    %196 = math.tanh %195 : vector<2x32xf32>
    %197 = arith.mulf %192, %196 : vector<2x32xf32>
    %198 = vector.extract_strided_slice %159 {offsets = [4, 0], sizes = [2, 128], strides = [1, 1]} : vector<16x128xf32> to vector<2x128xf32>
    %cst_38 = arith.constant dense<0.000000e+00> : vector<2x128xf32>
    %199 = tpu.matmul %197, %155, %cst_38 {dimension_numbers = #tpu.dot_dimension_numbers<[1], [0], [0], [1], [0, 0, 1, 1], [], []>} : vector<2x32xf32>, vector<32x128xf32>, vector<2x128xf32> -> vector<2x128xf32>
    %200 = arith.addf %198, %199 : vector<2x128xf32>
    %201 = arith.negf %200 : vector<2x128xf32>
    %202 = math.exp %201 : vector<2x128xf32>
    %cst_39 = arith.constant 1.000000e+00 : f32
    %203 = vector.broadcast %cst_39 : f32 to vector<2x128xf32>
    %204 = arith.addf %203, %202 : vector<2x128xf32>
    %205 = arith.divf %203, %204 : vector<2x128xf32>
    %206 = math.tanh %200 : vector<2x128xf32>
    %207 = vector.extract_strided_slice %205 {offsets = [0, 0], sizes = [2, 32], strides = [1, 1]} : vector<2x128xf32> to vector<2x32xf32>
    %208 = vector.extract_strided_slice %205 {offsets = [0, 32], sizes = [2, 32], strides = [1, 1]} : vector<2x128xf32> to vector<2x32xf32>
    %209 = vector.extract_strided_slice %206 {offsets = [0, 64], sizes = [2, 32], strides = [1, 1]} : vector<2x128xf32> to vector<2x32xf32>
    %210 = vector.extract_strided_slice %205 {offsets = [0, 96], sizes = [2, 32], strides = [1, 1]} : vector<2x128xf32> to vector<2x32xf32>
    %211 = arith.mulf %208, %195 : vector<2x32xf32>
    %212 = arith.mulf %207, %209 : vector<2x32xf32>
    %213 = arith.addf %211, %212 : vector<2x32xf32>
    %214 = math.tanh %213 : vector<2x32xf32>
    %215 = arith.mulf %210, %214 : vector<2x32xf32>
    %216 = vector.extract_strided_slice %159 {offsets = [6, 0], sizes = [2, 128], strides = [1, 1]} : vector<16x128xf32> to vector<2x128xf32>
    %cst_40 = arith.constant dense<0.000000e+00> : vector<2x128xf32>
    %217 = tpu.matmul %215, %155, %cst_40 {dimension_numbers = #tpu.dot_dimension_numbers<[1], [0], [0], [1], [0, 0, 1, 1], [], []>} : vector<2x32xf32>, vector<32x128xf32>, vector<2x128xf32> -> vector<2x128xf32>
    %218 = arith.addf %216, %217 : vector<2x128xf32>
    %219 = arith.negf %218 : vector<2x128xf32>
    %220 = math.exp %219 : vector<2x128xf32>
    %cst_41 = arith.constant 1.000000e+00 : f32
    %221 = vector.broadcast %cst_41 : f32 to vector<2x128xf32>
    %222 = arith.addf %221, %220 : vector<2x128xf32>
    %223 = arith.divf %221, %222 : vector<2x128xf32>
    %224 = math.tanh %218 : vector<2x128xf32>
    %225 = vector.extract_strided_slice %223 {offsets = [0, 0], sizes = [2, 32], strides = [1, 1]} : vector<2x128xf32> to vector<2x32xf32>
    %226 = vector.extract_strided_slice %223 {offsets = [0, 32], sizes = [2, 32], strides = [1, 1]} : vector<2x128xf32> to vector<2x32xf32>
    %227 = vector.extract_strided_slice %224 {offsets = [0, 64], sizes = [2, 32], strides = [1, 1]} : vector<2x128xf32> to vector<2x32xf32>
    %228 = vector.extract_strided_slice %223 {offsets = [0, 96], sizes = [2, 32], strides = [1, 1]} : vector<2x128xf32> to vector<2x32xf32>
    %229 = arith.mulf %226, %213 : vector<2x32xf32>
    %230 = arith.mulf %225, %227 : vector<2x32xf32>
    %231 = arith.addf %229, %230 : vector<2x32xf32>
    %232 = math.tanh %231 : vector<2x32xf32>
    %233 = arith.mulf %228, %232 : vector<2x32xf32>
    %234 = vector.extract_strided_slice %159 {offsets = [8, 0], sizes = [2, 128], strides = [1, 1]} : vector<16x128xf32> to vector<2x128xf32>
    %cst_42 = arith.constant dense<0.000000e+00> : vector<2x128xf32>
    %235 = tpu.matmul %233, %155, %cst_42 {dimension_numbers = #tpu.dot_dimension_numbers<[1], [0], [0], [1], [0, 0, 1, 1], [], []>} : vector<2x32xf32>, vector<32x128xf32>, vector<2x128xf32> -> vector<2x128xf32>
    %236 = arith.addf %234, %235 : vector<2x128xf32>
    %237 = arith.negf %236 : vector<2x128xf32>
    %238 = math.exp %237 : vector<2x128xf32>
    %cst_43 = arith.constant 1.000000e+00 : f32
    %239 = vector.broadcast %cst_43 : f32 to vector<2x128xf32>
    %240 = arith.addf %239, %238 : vector<2x128xf32>
    %241 = arith.divf %239, %240 : vector<2x128xf32>
    %242 = math.tanh %236 : vector<2x128xf32>
    %243 = vector.extract_strided_slice %241 {offsets = [0, 0], sizes = [2, 32], strides = [1, 1]} : vector<2x128xf32> to vector<2x32xf32>
    %244 = vector.extract_strided_slice %241 {offsets = [0, 32], sizes = [2, 32], strides = [1, 1]} : vector<2x128xf32> to vector<2x32xf32>
    %245 = vector.extract_strided_slice %242 {offsets = [0, 64], sizes = [2, 32], strides = [1, 1]} : vector<2x128xf32> to vector<2x32xf32>
    %246 = vector.extract_strided_slice %241 {offsets = [0, 96], sizes = [2, 32], strides = [1, 1]} : vector<2x128xf32> to vector<2x32xf32>
    %247 = arith.mulf %244, %231 : vector<2x32xf32>
    %248 = arith.mulf %243, %245 : vector<2x32xf32>
    %249 = arith.addf %247, %248 : vector<2x32xf32>
    %250 = math.tanh %249 : vector<2x32xf32>
    %251 = arith.mulf %246, %250 : vector<2x32xf32>
    %252 = vector.extract_strided_slice %159 {offsets = [10, 0], sizes = [2, 128], strides = [1, 1]} : vector<16x128xf32> to vector<2x128xf32>
    %cst_44 = arith.constant dense<0.000000e+00> : vector<2x128xf32>
    %253 = tpu.matmul %251, %155, %cst_44 {dimension_numbers = #tpu.dot_dimension_numbers<[1], [0], [0], [1], [0, 0, 1, 1], [], []>} : vector<2x32xf32>, vector<32x128xf32>, vector<2x128xf32> -> vector<2x128xf32>
    %254 = arith.addf %252, %253 : vector<2x128xf32>
    %255 = arith.negf %254 : vector<2x128xf32>
    %256 = math.exp %255 : vector<2x128xf32>
    %cst_45 = arith.constant 1.000000e+00 : f32
    %257 = vector.broadcast %cst_45 : f32 to vector<2x128xf32>
    %258 = arith.addf %257, %256 : vector<2x128xf32>
    %259 = arith.divf %257, %258 : vector<2x128xf32>
    %260 = math.tanh %254 : vector<2x128xf32>
    %261 = vector.extract_strided_slice %259 {offsets = [0, 0], sizes = [2, 32], strides = [1, 1]} : vector<2x128xf32> to vector<2x32xf32>
    %262 = vector.extract_strided_slice %259 {offsets = [0, 32], sizes = [2, 32], strides = [1, 1]} : vector<2x128xf32> to vector<2x32xf32>
    %263 = vector.extract_strided_slice %260 {offsets = [0, 64], sizes = [2, 32], strides = [1, 1]} : vector<2x128xf32> to vector<2x32xf32>
    %264 = vector.extract_strided_slice %259 {offsets = [0, 96], sizes = [2, 32], strides = [1, 1]} : vector<2x128xf32> to vector<2x32xf32>
    %265 = arith.mulf %262, %249 : vector<2x32xf32>
    %266 = arith.mulf %261, %263 : vector<2x32xf32>
    %267 = arith.addf %265, %266 : vector<2x32xf32>
    %268 = math.tanh %267 : vector<2x32xf32>
    %269 = arith.mulf %264, %268 : vector<2x32xf32>
    %270 = vector.extract_strided_slice %159 {offsets = [12, 0], sizes = [2, 128], strides = [1, 1]} : vector<16x128xf32> to vector<2x128xf32>
    %cst_46 = arith.constant dense<0.000000e+00> : vector<2x128xf32>
    %271 = tpu.matmul %269, %155, %cst_46 {dimension_numbers = #tpu.dot_dimension_numbers<[1], [0], [0], [1], [0, 0, 1, 1], [], []>} : vector<2x32xf32>, vector<32x128xf32>, vector<2x128xf32> -> vector<2x128xf32>
    %272 = arith.addf %270, %271 : vector<2x128xf32>
    %273 = arith.negf %272 : vector<2x128xf32>
    %274 = math.exp %273 : vector<2x128xf32>
    %cst_47 = arith.constant 1.000000e+00 : f32
    %275 = vector.broadcast %cst_47 : f32 to vector<2x128xf32>
    %276 = arith.addf %275, %274 : vector<2x128xf32>
    %277 = arith.divf %275, %276 : vector<2x128xf32>
    %278 = math.tanh %272 : vector<2x128xf32>
    %279 = vector.extract_strided_slice %277 {offsets = [0, 0], sizes = [2, 32], strides = [1, 1]} : vector<2x128xf32> to vector<2x32xf32>
    %280 = vector.extract_strided_slice %277 {offsets = [0, 32], sizes = [2, 32], strides = [1, 1]} : vector<2x128xf32> to vector<2x32xf32>
    %281 = vector.extract_strided_slice %278 {offsets = [0, 64], sizes = [2, 32], strides = [1, 1]} : vector<2x128xf32> to vector<2x32xf32>
    %282 = vector.extract_strided_slice %277 {offsets = [0, 96], sizes = [2, 32], strides = [1, 1]} : vector<2x128xf32> to vector<2x32xf32>
    %283 = arith.mulf %280, %267 : vector<2x32xf32>
    %284 = arith.mulf %279, %281 : vector<2x32xf32>
    %285 = arith.addf %283, %284 : vector<2x32xf32>
    %286 = math.tanh %285 : vector<2x32xf32>
    %287 = arith.mulf %282, %286 : vector<2x32xf32>
    %288 = vector.extract_strided_slice %159 {offsets = [14, 0], sizes = [2, 128], strides = [1, 1]} : vector<16x128xf32> to vector<2x128xf32>
    %cst_48 = arith.constant dense<0.000000e+00> : vector<2x128xf32>
    %289 = tpu.matmul %287, %155, %cst_48 {dimension_numbers = #tpu.dot_dimension_numbers<[1], [0], [0], [1], [0, 0, 1, 1], [], []>} : vector<2x32xf32>, vector<32x128xf32>, vector<2x128xf32> -> vector<2x128xf32>
    %290 = arith.addf %288, %289 : vector<2x128xf32>
    %291 = arith.negf %290 : vector<2x128xf32>
    %292 = math.exp %291 : vector<2x128xf32>
    %cst_49 = arith.constant 1.000000e+00 : f32
    %293 = vector.broadcast %cst_49 : f32 to vector<2x128xf32>
    %294 = arith.addf %293, %292 : vector<2x128xf32>
    %295 = arith.divf %293, %294 : vector<2x128xf32>
    %296 = math.tanh %290 : vector<2x128xf32>
    %297 = vector.extract_strided_slice %295 {offsets = [0, 0], sizes = [2, 32], strides = [1, 1]} : vector<2x128xf32> to vector<2x32xf32>
    %298 = vector.extract_strided_slice %295 {offsets = [0, 32], sizes = [2, 32], strides = [1, 1]} : vector<2x128xf32> to vector<2x32xf32>
    %299 = vector.extract_strided_slice %296 {offsets = [0, 64], sizes = [2, 32], strides = [1, 1]} : vector<2x128xf32> to vector<2x32xf32>
    %300 = vector.extract_strided_slice %295 {offsets = [0, 96], sizes = [2, 32], strides = [1, 1]} : vector<2x128xf32> to vector<2x32xf32>
    %301 = arith.mulf %298, %285 : vector<2x32xf32>
    %302 = arith.mulf %297, %299 : vector<2x32xf32>
    %303 = arith.addf %301, %302 : vector<2x32xf32>
    %304 = math.tanh %303 : vector<2x32xf32>
    %305 = arith.mulf %300, %304 : vector<2x32xf32>
    %306 = tpu.concatenate %179, %197, %215, %233, %251, %269, %287, %305 in 1 : vector<2x32xf32>, vector<2x32xf32>, vector<2x32xf32>, vector<2x32xf32>, vector<2x32xf32>, vector<2x32xf32>, vector<2x32xf32>, vector<2x32xf32> -> vector<2x256xf32>
    %c0_50 = arith.constant 0 : index
    %c0_51 = arith.constant 0 : index
    %307 = vector.load %arg14[%c0_50, %c0_51] : memref<2x256xf32, #tpu.memory_space<vmem>>, vector<2x256xf32>
    tpu.vector_store %arg14[%c0_50, %c0_51], %306 {strides = array<i32>} : memref<2x256xf32, #tpu.memory_space<vmem>>, vector<2x256xf32>,
    %c0_52 = arith.constant 0 : index
    %c0_53 = arith.constant 0 : index
    %308 = vector.load %arg7[%c0_52, %c0_53] : memref<32x32xf32, #tpu.memory_space<vmem>>, vector<32x32xf32>
    %cst_54 = arith.constant dense<0.000000e+00> : vector<2x32xf32>
    %309 = tpu.matmul %305, %308, %cst_54 {dimension_numbers = #tpu.dot_dimension_numbers<[1], [0], [0], [1], [0, 0, 1, 1], [], []>} : vector<2x32xf32>, vector<32x32xf32>, vector<2x32xf32> -> vector<2x32xf32>
    %c0_55 = arith.constant 0 : index
    %c0_56 = arith.constant 0 : index
    %310 = vector.load %arg8[%c0_55, %c0_56] : memref<1x32xf32, #tpu.memory_space<vmem>>, vector<1x32xf32>
    %311 = vector.broadcast %310 : vector<1x32xf32> to vector<2x32xf32>
    %312 = arith.addf %309, %311 : vector<2x32xf32>
    %cst_57 = arith.constant 0.000000e+00 : f32
    %313 = vector.broadcast %cst_57 : f32 to vector<2x32xf32>
    %314 = arith.maximumf %312, %313 : vector<2x32xf32>
    %c0_58 = arith.constant 0 : index
    %c0_59 = arith.constant 0 : index
    %315 = vector.load %arg9[%c0_58, %c0_59] : memref<32x16xf32, #tpu.memory_space<vmem>>, vector<32x16xf32>
    %cst_60 = arith.constant dense<0.000000e+00> : vector<2x16xf32>
    %316 = tpu.matmul %314, %315, %cst_60 {dimension_numbers = #tpu.dot_dimension_numbers<[1], [0], [0], [1], [0, 0, 1, 1], [], []>} : vector<2x32xf32>, vector<32x16xf32>, vector<2x16xf32> -> vector<2x16xf32>
    %c0_61 = arith.constant 0 : index
    %c0_62 = arith.constant 0 : index
    %317 = vector.load %arg10[%c0_61, %c0_62] : memref<1x16xf32, #tpu.memory_space<vmem>>, vector<1x16xf32>
    %318 = vector.broadcast %317 : vector<1x16xf32> to vector<2x16xf32>
    %319 = arith.addf %316, %318 : vector<2x16xf32>
    %cst_63 = arith.constant 0.000000e+00 : f32
    %320 = vector.broadcast %cst_63 : f32 to vector<2x16xf32>
    %321 = arith.maximumf %319, %320 : vector<2x16xf32>
    %c0_64 = arith.constant 0 : index
    %c0_65 = arith.constant 0 : index
    %322 = vector.load %arg11[%c0_64, %c0_65] : memref<16x1xf32, #tpu.memory_space<vmem>>, vector<16x1xf32>
    %cst_66 = arith.constant dense<0.000000e+00> : vector<2x1xf32>
    %323 = tpu.matmul %321, %322, %cst_66 {dimension_numbers = #tpu.dot_dimension_numbers<[1], [0], [0], [1], [0, 0, 1, 1], [], []>} : vector<2x16xf32>, vector<16x1xf32>, vector<2x1xf32> -> vector<2x1xf32>
    %c0_67 = arith.constant 0 : index
    %c0_68 = arith.constant 0 : index
    %324 = vector.load %arg12[%c0_67, %c0_68] : memref<1x1xf32, #tpu.memory_space<vmem>>, vector<1x1xf32>
    %325 = vector.broadcast %324 : vector<1x1xf32> to vector<2x1xf32>
    %326 = arith.addf %323, %325 : vector<2x1xf32>
    %c0_69 = arith.constant 0 : index
    %c0_70 = arith.constant 0 : index
    %327 = vector.load %arg13[%c0_69, %c0_70] : memref<2x1xf32, #tpu.memory_space<vmem>>, vector<2x1xf32>
    tpu.vector_store %arg13[%c0_69, %c0_70], %326 {strides = array<i32>} : memref<2x1xf32, #tpu.memory_space<vmem>>, vector<2x1xf32>,
    return
  }
}

</mosaic_0001>

<llo_original>
// kernel: tpu_custom_call.1
$region0: #{tpu_custom_call.1}
  #allocation0 [shape = 'u32[]', space=smem, size = 0x4, offset = 0x4, fixed_abs, tag = 'smem constant byte address 0x4 - core index']
  #allocation1 [shape = 'u32[144,128]{1,0:T(1,128)}', space=vmem, size = 0x12000, scoped, tag = 'internal scratch']
  #allocation2 [shape = 'f32[1,1]{1,0:T(1,128)S(1)}', space=vmem, size = 0x200, scoped, tag = 'scoped memory for tpu_custom_call.1']
  %s0 = inlined_call_operand.hbm [shape: f32[16,16], index: 0, kind: input, shape index: {}]
  %s1 = inlined_call_operand.hbm [shape: f32[16,128], index: 1, kind: input, shape index: {}]
  %s2 = inlined_call_operand.vmem [shape: f32[32,128], index: 2, kind: input, shape index: {}]
  %s3 = inlined_call_operand.hbm [shape: f32[1,128], index: 3, kind: input, shape index: {}]
  %s4 = inlined_call_operand.vmem [shape: f32[32,128], index: 4, kind: input, shape index: {}]
  %s5 = inlined_call_operand.hbm [shape: f32[32,128], index: 5, kind: input, shape index: {}]
  %s6 = inlined_call_operand.vmem [shape: f32[1,128], index: 6, kind: input, shape index: {}]
  %s7 = inlined_call_operand.hbm [shape: f32[32,32], index: 7, kind: input, shape index: {}]
  %s8 = inlined_call_operand.vmem [shape: f32[1,32], index: 8, kind: input, shape index: {}]
  %s9 = inlined_call_operand.vmem [shape: f32[32,16], index: 9, kind: input, shape index: {}]
  %s10 = inlined_call_operand.vmem [shape: f32[1,16], index: 10, kind: input, shape index: {}]
  %s11 = inlined_call_operand.vmem [shape: f32[16,1], index: 11, kind: input, shape index: {}]
  %s12 = inlined_call_operand.<no memory space> [shape: f32[1,1], index: 12, kind: input, shape index: {}]
  %s13 = inlined_call_operand.vmem [shape: f32[2,1], index: 13, kind: output, shape index: {0}]
  %s14 = inlined_call_operand.hbm [shape: f32[2,256], index: 14, kind: output, shape index: {1}]
  %15 = xla_tuple %s13, %s14
  %s16 = sld [smem:[#allocation0]]
  $region90: #{tpu_custom_call.1} parent=0
    _
  %s18 = ssub.s32 1, %s16
  %s19 = scalar_select 0, %s18, %s16
  %v20 = vstv %s12
  %21 = vst [vmem:[#allocation2] sm:$0x1] %v20
  $region1: #{tpu_custom_call.1} parent=0
    #allocation3 [shape = 'u8[8192]{0}', space=vmem, size = 0x2000, scoped, tag = 'input window, operand 0, single buffered']
    #allocation4 [shape = 's32[1]{0}', space=sflag, size = 0x4, scoped, tag = 'scoped memory for tpu_custom_call.1']
    #allocation5 [shape = 's32[1]{0}', space=sflag, size = 0x4, scoped, tag = 'scoped memory for tpu_custom_call.1']
    #allocation6 [shape = 'u8[8192]{0}', space=vmem, size = 0x2000, scoped, tag = 'input window, operand 1, single buffered']
    #allocation7 [shape = 's32[1]{0}', space=sflag, size = 0x4, scoped, tag = 'scoped memory for tpu_custom_call.1']
    #allocation8 [shape = 'u8[512]{0}', space=vmem, size = 0x400, scoped, tag = 'input window, operand 3, single buffered']
    #allocation9 [shape = 'u8[16384]{0}', space=vmem, size = 0x4000, scoped, tag = 'input window, operand 5, single buffered']
    #allocation10 [shape = 's32[1]{0}', space=sflag, size = 0x4, scoped, tag = 'scoped memory for tpu_custom_call.1']
    #allocation11 [shape = 'u8[16384]{0}', space=vmem, size = 0x4000, scoped, tag = 'input window, operand 7, single buffered']
    #allocation12 [shape = 'u8[2048]{0}', space=vmem, size = 0x800, scoped, tag = 'output window, operand 1, single buffered']
    %22 = vsyncpa [#allocation4], 0
    %23 = vsyncpa [#allocation7], 0
    %24 = vsyncpa [#allocation10], 0
    %25 = vsyncpa [#allocation5], 0
    // Predicated region
    $region2: #{tpu_custom_call.1} parent=1 // pred_check
      _
    $region3: #{tpu_custom_call.1} parent=1 // pred_check_branch
      %27 = sbr.rel (0) target = $region5
    $region4: #{tpu_custom_call.1} parent=1 // pred_region
      %s29 = ssub.s32 256, 256
      %30 = vsyncadd [#allocation4], %s29
      %s31 = sshll.u32 [#allocation3], 4
      %s32 = int_to_ptr.vmem [resolvable:$true] %s31
      %37 = dma.hbm_to_vmem [thread:$0]  %s0, 256, %s32, [#allocation4], 128, 128, 8
    $region5: #{tpu_custom_call.1} parent=1 // pred_fallthru
      _
    // Predicated region
    $region6: #{tpu_custom_call.1} parent=1 // pred_check
      _
    $region7: #{tpu_custom_call.1} parent=1 // pred_check_branch
      %39 = sbr.rel (0) target = $region9
    $region8: #{tpu_custom_call.1} parent=1 // pred_region
      %s41 = ssub.s32 256, 256
      %42 = vsyncadd [#allocation7], %s41
      %s43 = sshll.u32 [#allocation6], 4
      %s44 = int_to_ptr.vmem [resolvable:$true] %s43
      %49 = dma.hbm_to_vmem [thread:$0]  %s1, 256, %s44, [#allocation7], 128, 128, 8
    $region9: #{tpu_custom_call.1} parent=1 // pred_fallthru
      _
    // Predicated region
    $region10: #{tpu_custom_call.1} parent=1 // pred_check
      _
    $region11: #{tpu_custom_call.1} parent=1 // pred_check_branch
      %51 = sbr.rel (0) target = $region13
    $region12: #{tpu_custom_call.1} parent=1 // pred_region
      _
    $region13: #{tpu_custom_call.1} parent=1 // pred_fallthru
      _
    // Predicated region
    $region14: #{tpu_custom_call.1} parent=1 // pred_check
      _
    $region15: #{tpu_custom_call.1} parent=1 // pred_check_branch
      %53 = sbr.rel (0) target = $region17
    $region16: #{tpu_custom_call.1} parent=1 // pred_region
      %s55 = ssub.s32 16, 16
      %56 = vsyncadd [#allocation7], %s55
      %s58 = sshll.u32 [#allocation8], 4
      %s59 = int_to_ptr.vmem [resolvable:$true] %s58
      %61 = dma.hbm_to_vmem [thread:$0]  %s3, 16, %s59, [#allocation7]
    $region17: #{tpu_custom_call.1} parent=1 // pred_fallthru
      _
    // Predicated region
    $region18: #{tpu_custom_call.1} parent=1 // pred_check
      _
    $region19: #{tpu_custom_call.1} parent=1 // pred_check_branch
      %63 = sbr.rel (0) target = $region21
    $region20: #{tpu_custom_call.1} parent=1 // pred_region
      _
    $region21: #{tpu_custom_call.1} parent=1 // pred_fallthru
      _
    // Predicated region
    $region22: #{tpu_custom_call.1} parent=1 // pred_check
      _
    $region23: #{tpu_custom_call.1} parent=1 // pred_check_branch
      %65 = sbr.rel (0) target = $region25
    $region24: #{tpu_custom_call.1} parent=1 // pred_region
      %s67 = ssub.s32 512, 512
      %68 = vsyncadd [#allocation10], %s67
      %s69 = sshll.u32 [#allocation9], 4
      %s70 = int_to_ptr.vmem [resolvable:$true] %s69
      %75 = dma.hbm_to_vmem [thread:$0]  %s5, 512, %s70, [#allocation10], 128, 128, 8
    $region25: #{tpu_custom_call.1} parent=1 // pred_fallthru
      _
    // Predicated region
    $region26: #{tpu_custom_call.1} parent=1 // pred_check
      _
    $region27: #{tpu_custom_call.1} parent=1 // pred_check_branch
      %77 = sbr.rel (0) target = $region29
    $region28: #{tpu_custom_call.1} parent=1 // pred_region
      _
    $region29: #{tpu_custom_call.1} parent=1 // pred_fallthru
      _
    // Predicated region
    $region30: #{tpu_custom_call.1} parent=1 // pred_check
      _
    $region31: #{tpu_custom_call.1} parent=1 // pred_check_branch
      %79 = sbr.rel (0) target = $region33
    $region32: #{tpu_custom_call.1} parent=1 // pred_region
      %s81 = ssub.s32 512, 512
      %82 = vsyncadd [#allocation10], %s81
      %s83 = sshll.u32 [#allocation11], 4
      %s84 = int_to_ptr.vmem [resolvable:$true] %s83
      %89 = dma.hbm_to_vmem [thread:$0]  %s7, 512, %s84, [#allocation10], 128, 128, 8
    $region33: #{tpu_custom_call.1} parent=1 // pred_fallthru
      _
    // Predicated region
    $region34: #{tpu_custom_call.1} parent=1 // pred_check
      _
    $region35: #{tpu_custom_call.1} parent=1 // pred_check_branch
      %91 = sbr.rel (0) target = $region37
    $region36: #{tpu_custom_call.1} parent=1 // pred_region
      _
    $region37: #{tpu_custom_call.1} parent=1 // pred_fallthru
      _
    // Predicated region
    $region38: #{tpu_custom_call.1} parent=1 // pred_check
      _
    $region39: #{tpu_custom_call.1} parent=1 // pred_check_branch
      %93 = sbr.rel (0) target = $region41
    $region40: #{tpu_custom_call.1} parent=1 // pred_region
      _
    $region41: #{tpu_custom_call.1} parent=1 // pred_fallthru
      _
    // Predicated region
    $region42: #{tpu_custom_call.1} parent=1 // pred_check
      _
    $region43: #{tpu_custom_call.1} parent=1 // pred_check_branch
      %95 = sbr.rel (0) target = $region45
    $region44: #{tpu_custom_call.1} parent=1 // pred_region
      _
    $region45: #{tpu_custom_call.1} parent=1 // pred_fallthru
      _
    // Predicated region
    $region46: #{tpu_custom_call.1} parent=1 // pred_check
      _
    $region47: #{tpu_custom_call.1} parent=1 // pred_check_branch
      %97 = sbr.rel (0) target = $region49
    $region48: #{tpu_custom_call.1} parent=1 // pred_region
      _
    $region49: #{tpu_custom_call.1} parent=1 // pred_fallthru
      _
    // Predicated region
    $region50: #{tpu_custom_call.1} parent=1 // pred_check
      _
    $region51: #{tpu_custom_call.1} parent=1 // pred_check_branch
      %99 = sbr.rel (0) target = $region53
    $region52: #{tpu_custom_call.1} parent=1 // pred_region
      _
    $region53: #{tpu_custom_call.1} parent=1 // pred_fallthru
      _
    // Predicated region
    $region54: #{tpu_custom_call.1} parent=1 // pred_check
      _
    $region55: #{tpu_custom_call.1} parent=1 // pred_check_branch
      %101 = sbr.rel (0) target = $region57
    $region56: #{tpu_custom_call.1} parent=1 // pred_region
      %102 = dma.done [#allocation4], 256
    $region57: #{tpu_custom_call.1} parent=1 // pred_fallthru
      _
    // Predicated region
    $region58: #{tpu_custom_call.1} parent=1 // pred_check
      _
    $region59: #{tpu_custom_call.1} parent=1 // pred_check_branch
      %104 = sbr.rel (0) target = $region61
    $region60: #{tpu_custom_call.1} parent=1 // pred_region
      %105 = dma.done [#allocation7], 256
    $region61: #{tpu_custom_call.1} parent=1 // pred_fallthru
      _
    // Predicated region
    $region62: #{tpu_custom_call.1} parent=1 // pred_check
      _
    $region63: #{tpu_custom_call.1} parent=1 // pred_check_branch
      %107 = sbr.rel (0) target = $region65
    $region64: #{tpu_custom_call.1} parent=1 // pred_region
      %108 = dma.done [#allocation7], 16
    $region65: #{tpu_custom_call.1} parent=1 // pred_fallthru
      _
    // Predicated region
    $region66: #{tpu_custom_call.1} parent=1 // pred_check
      _
    $region67: #{tpu_custom_call.1} parent=1 // pred_check_branch
      %110 = sbr.rel (0) target = $region69
    $region68: #{tpu_custom_call.1} parent=1 // pred_region
      %111 = dma.done [#allocation10], 512
    $region69: #{tpu_custom_call.1} parent=1 // pred_fallthru
      _
    // Predicated region
    $region70: #{tpu_custom_call.1} parent=1 // pred_check
      _
    $region71: #{tpu_custom_call.1} parent=1 // pred_check_branch
      %113 = sbr.rel (0) target = $region73
    $region72: #{tpu_custom_call.1} parent=1 // pred_region
      %114 = dma.done [#allocation10], 512
    $region73: #{tpu_custom_call.1} parent=1 // pred_fallthru
      _
    %v115 = vld [vmem:[#allocation3] sm:$0xff]
    %v116 = vld [vmem:[#allocation3 + $0x8] sm:$0xff]
    %v117 = vld [vmem:[#allocation6] sm:$0xff]
    %v118 = vld [vmem:[#allocation6 + $0x8] sm:$0xff]
    %v119 = vld [vmem:[%s2] sm:$0xff]
    %v120 = vld [vmem:[%s2 + $0x8] sm:$0xff]
    %v121 = vld [vmem:[%s2 + $0x10] sm:$0xff]
    %v122 = vld [vmem:[%s2 + $0x18] sm:$0xff]
    %v123 = vld [vmem:[#allocation8] sm:$0x1]
    %v125 = vlaneseq
    %v126 = vshrl.u32 %v125, 7
    %v127 = vsub.s32 0, %v126
    %v128 = vrot.slane %v123, %v127
    %vm130 = vcmask 130048
    %v132 = vsel %vm130, %v115, 0
    %v135 = vsel %vm130, %v116, 0
    %137 = vmatprep.subr.mxu0 0.0
    %138 = vmatpush1.msra.mxu0 %v117
    %139 = vmatprep.subr.mxu0 0.0
    %140 = vmatpush1.msra.mxu0 %v118
    %141 = vmatprep.subr.mxu0 0.0
    %142 = vmatpush1.msra.mxu0 0.0
    %143 = vmatprep.subr.mxu0 0.0
    %144 = vmatpush1.msra.mxu0 0.0
    %145 = vmatprep.subr.mxu0 0.0
    %146 = vmatpush1.msra.mxu0 0.0
    %147 = vmatprep.subr.mxu0 0.0
    %148 = vmatpush1.msra.mxu0 0.0
    %149 = vmatprep.subr.mxu0 0.0
    %150 = vmatpush1.msra.mxu0 0.0
    %151 = vmatprep.subr.mxu0 0.0
    %152 = vmatpush1.msra.mxu0 0.0
    %153 = vmatprep.subr.mxu0 0.0
    %154 = vmatpush1.msra.mxu0 0.0
    %155 = vmatprep.subr.mxu0 0.0
    %156 = vmatpush1.msra.mxu0 0.0
    %157 = vmatprep.subr.mxu0 0.0
    %158 = vmatpush1.msra.mxu0 0.0
    %159 = vmatprep.subr.mxu0 0.0
    %160 = vmatpush1.msra.mxu0 0.0
    %161 = vmatprep.subr.mxu0 0.0
    %162 = vmatpush1.msra.mxu0 0.0
    %163 = vmatprep.subr.mxu0 0.0
    %164 = vmatpush1.msra.mxu0 0.0
    %165 = vmatprep.subr.mxu0 0.0
    %166 = vmatpush1.msra.mxu0 0.0
    %167 = vmatprep.subr.mxu0 0.0
    %168 = vmatpush1.msra.mxu0 0.0
    %169 = vmatprep.subr.mxu0 0.0
    %170 = vmatpush1.msra.mxu0 0.0
    %171 = vmatprep.subr.mxu0 0.0
    %172 = vmatpush1.msra.mxu0 0.0
    %173 = vmatprep.subr.mxu0 0.0
    %174 = vmatpush1.msra.mxu0 0.0
    %175 = vmatprep.subr.mxu0 0.0
    %176 = vmatpush1.msra.mxu0 0.0
    %177 = vmatprep.subr.mxu0 0.0
    %178 = vmatpush1.msra.mxu0 0.0
    %179 = vmatprep.subr.mxu0 0.0
    %180 = vmatpush1.msra.mxu0 0.0
    %181 = vmatprep.subr.mxu0 0.0
    %182 = vmatpush1.msra.mxu0 0.0
    %183 = vmatprep.subr.mxu0 0.0
    %184 = vmatpush1.msra.mxu0 0.0
    %185 = vmatprep.subr.mxu0 0.0
    %186 = vmatpush1.msra.mxu0 0.0
    %187 = vmatprep.subr.mxu0 0.0
    %188 = vmatpush1.msra.mxu0 0.0
    %189 = vmatprep.subr.mxu0 0.0
    %190 = vmatpush1.msra.mxu0 0.0
    %191 = vmatprep.subr.mxu0 0.0
    %192 = vmatpush1.msra.mxu0 0.0
    %193 = vmatprep.subr.mxu0 0.0
    %194 = vmatpush1.msra.mxu0 0.0
    %195 = vmatprep.subr.mxu0 0.0
    %196 = vmatpush1.msra.mxu0 0.0
    %197 = vmatprep.subr.mxu0 0.0
    %198 = vmatpush1.msra.mxu0 0.0
    %199 = vmatprep.subr.mxu0 0.0
    %200 = vmatpush1.msra.mxu0 0.0
    %201 = vmatprep.mubr.f32.mxu0 0.0
    %202 = vmatmul.mubr.f32.gmra.mrb[0].mxu0 %v132
    %v203 = vpop.f32.mrb[0].mxu0
    %v204 = vadd.f32 %v128, %v203
    %v205 = vpop.f32.mrb[0].mxu0
    %206 = vmatprep.mubr.f32.mxu0 0.0
    %207 = vmatmul.mubr.f32.gmra.mrb[0].mxu0 %v135
    %v208 = vpop.f32.mrb[0].mxu0
    %v209 = vadd.f32 %v128, %v208
    %v210 = vpop.f32.mrb[0].mxu0
    %211 = vdwg.mxu0
    %vm212 = vcmask 261120
    %v214 = vsel %vm212, 0.0, 0
    %216 = vmatprep.subr.mxu0 0.0
    %217 = vmatpush1.msra.mxu0 %v119
    %218 = vmatprep.subr.mxu0 0.0
    %219 = vmatpush1.msra.mxu0 %v120
    %220 = vmatprep.subr.mxu0 0.0
    %221 = vmatpush1.msra.mxu0 %v121
    %222 = vmatprep.subr.mxu0 0.0
    %223 = vmatpush1.msra.mxu0 %v122
    %224 = vmatprep.subr.mxu0 0.0
    %225 = vmatpush1.msra.mxu0 0.0
    %226 = vmatprep.subr.mxu0 0.0
    %227 = vmatpush1.msra.mxu0 0.0
    %228 = vmatprep.subr.mxu0 0.0
    %229 = vmatpush1.msra.mxu0 0.0
    %230 = vmatprep.subr.mxu0 0.0
    %231 = vmatpush1.msra.mxu0 0.0
    %232 = vmatprep.subr.mxu0 0.0
    %233 = vmatpush1.msra.mxu0 0.0
    %234 = vmatprep.subr.mxu0 0.0
    %235 = vmatpush1.msra.mxu0 0.0
    %236 = vmatprep.subr.mxu0 0.0
    %237 = vmatpush1.msra.mxu0 0.0
    %238 = vmatprep.subr.mxu0 0.0
    %239 = vmatpush1.msra.mxu0 0.0
    %240 = vmatprep.subr.mxu0 0.0
    %241 = vmatpush1.msra.mxu0 0.0
    %242 = vmatprep.subr.mxu0 0.0
    %243 = vmatpush1.msra.mxu0 0.0
    %244 = vmatprep.subr.mxu0 0.0
    %245 = vmatpush1.msra.mxu0 0.0
    %246 = vmatprep.subr.mxu0 0.0
    %247 = vmatpush1.msra.mxu0 0.0
    %248 = vmatprep.subr.mxu0 0.0
    %249 = vmatpush1.msra.mxu0 0.0
    %250 = vmatprep.subr.mxu0 0.0
    %251 = vmatpush1.msra.mxu0 0.0
    %252 = vmatprep.subr.mxu0 0.0
    %253 = vmatpush1.msra.mxu0 0.0
    %254 = vmatprep.subr.mxu0 0.0
    %255 = vmatpush1.msra.mxu0 0.0
    %256 = vmatprep.subr.mxu0 0.0
    %257 = vmatpush1.msra.mxu0 0.0
    %258 = vmatprep.subr.mxu0 0.0
    %259 = vmatpush1.msra.mxu0 0.0
    %260 = vmatprep.subr.mxu0 0.0
    %261 = vmatpush1.msra.mxu0 0.0
    %262 = vmatprep.subr.mxu0 0.0
    %263 = vmatpush1.msra.mxu0 0.0
    %264 = vmatprep.subr.mxu0 0.0
    %265 = vmatpush1.msra.mxu0 0.0
    %266 = vmatprep.subr.mxu0 0.0
    %267 = vmatpush1.msra.mxu0 0.0
    %268 = vmatprep.subr.mxu0 0.0
    %269 = vmatpush1.msra.mxu0 0.0
    %270 = vmatprep.subr.mxu0 0.0
    %271 = vmatpush1.msra.mxu0 0.0
    %272 = vmatprep.subr.mxu0 0.0
    %273 = vmatpush1.msra.mxu0 0.0
    %274 = vmatprep.subr.mxu0 0.0
    %275 = vmatpush1.msra.mxu0 0.0
    %276 = vmatprep.subr.mxu0 0.0
    %277 = vmatpush1.msra.mxu0 0.0
    %278 = vmatprep.subr.mxu0 0.0
    %279 = vmatpush1.msra.mxu0 0.0
    %280 = vmatprep.mubr.f32.mxu0 0.0
    %281 = vmatmul.mubr.f32.gmra.mrb[0].mxu0 %v214
    %v282 = vpop.f32.mrb[0].mxu0
    %v283 = vadd.f32 0.0, %v282
    %v284 = vpop.f32.mrb[0].mxu0
    %285 = vdwg.mxu0
    %v286 = vadd.f32 %v204, %v283
    %v287 = vxor.u32 %v286, 2147483648
    %v288 = vmul.f32 %v287, 1.442695
    %v289 = vpow.pop %v288
    %v290 = vadd.f32 %v289, 1.0
    %v291 = vrcp.pop %v290
    %v292 = vmul.f32 1.0, %v291
    %v293 = vtanh.pop %v286
    %v294 = vmul.f32 %v292, 0.0
    %296 = vrot.lane.b32.xlu0 %v293, 64
    %v297 = vpop.permute.xlu0 %296
    %v299 = vmul.f32 %v292, %v297
    %301 = vrot.lane.b32.xlu0 %v299, 32
    %v302 = vpop.permute.xlu0 %301
    %v304 = vadd.f32 %v294, %v302
    %v305 = vtanh.pop %v304
    %307 = vrot.lane.b32.xlu0 %v305, 64
    %v308 = vpop.permute.xlu0 %307
    %v310 = vmul.f32 %v292, %v308
    %312 = vrot.lane.b32.xlu0 %v310, 32
    %v313 = vpop.permute.xlu0 %312
    %v314 = vsel %vm212, %v313, 0
    %316 = vmatprep.subr.mxu0 0.0
    %317 = vmatpush1.msra.mxu0 %v119
    %318 = vmatprep.subr.mxu0 0.0
    %319 = vmatpush1.msra.mxu0 %v120
    %320 = vmatprep.subr.mxu0 0.0
    %321 = vmatpush1.msra.mxu0 %v121
    %322 = vmatprep.subr.mxu0 0.0
    %323 = vmatpush1.msra.mxu0 %v122
    %324 = vmatprep.subr.mxu0 0.0
    %325 = vmatpush1.msra.mxu0 0.0
    %326 = vmatprep.subr.mxu0 0.0
    %327 = vmatpush1.msra.mxu0 0.0
    %328 = vmatprep.subr.mxu0 0.0
    %329 = vmatpush1.msra.mxu0 0.0
    %330 = vmatprep.subr.mxu0 0.0
    %331 = vmatpush1.msra.mxu0 0.0
    %332 = vmatprep.subr.mxu0 0.0
    %333 = vmatpush1.msra.mxu0 0.0
    %334 = vmatprep.subr.mxu0 0.0
    %335 = vmatpush1.msra.mxu0 0.0
    %336 = vmatprep.subr.mxu0 0.0
    %337 = vmatpush1.msra.mxu0 0.0
    %338 = vmatprep.subr.mxu0 0.0
    %339 = vmatpush1.msra.mxu0 0.0
    %340 = vmatprep.subr.mxu0 0.0
    %341 = vmatpush1.msra.mxu0 0.0
    %342 = vmatprep.subr.mxu0 0.0
    %343 = vmatpush1.msra.mxu0 0.0
    %344 = vmatprep.subr.mxu0 0.0
    %345 = vmatpush1.msra.mxu0 0.0
    %346 = vmatprep.subr.mxu0 0.0
    %347 = vmatpush1.msra.mxu0 0.0
    %348 = vmatprep.subr.mxu0 0.0
    %349 = vmatpush1.msra.mxu0 0.0
    %350 = vmatprep.subr.mxu0 0.0
    %351 = vmatpush1.msra.mxu0 0.0
    %352 = vmatprep.subr.mxu0 0.0
    %353 = vmatpush1.msra.mxu0 0.0
    %354 = vmatprep.subr.mxu0 0.0
    %355 = vmatpush1.msra.mxu0 0.0
    %356 = vmatprep.subr.mxu0 0.0
    %357 = vmatpush1.msra.mxu0 0.0
    %358 = vmatprep.subr.mxu0 0.0
    %359 = vmatpush1.msra.mxu0 0.0
    %360 = vmatprep.subr.mxu0 0.0
    %361 = vmatpush1.msra.mxu0 0.0
    %362 = vmatprep.subr.mxu0 0.0
    %363 = vmatpush1.msra.mxu0 0.0
    %364 = vmatprep.subr.mxu0 0.0
    %365 = vmatpush1.msra.mxu0 0.0
    %366 = vmatprep.subr.mxu0 0.0
    %367 = vmatpush1.msra.mxu0 0.0
    %368 = vmatprep.subr.mxu0 0.0
    %369 = vmatpush1.msra.mxu0 0.0
    %370 = vmatprep.subr.mxu0 0.0
    %371 = vmatpush1.msra.mxu0 0.0
    %372 = vmatprep.subr.mxu0 0.0
    %373 = vmatpush1.msra.mxu0 0.0
    %374 = vmatprep.subr.mxu0 0.0
    %375 = vmatpush1.msra.mxu0 0.0
    %376 = vmatprep.subr.mxu0 0.0
    %377 = vmatpush1.msra.mxu0 0.0
    %378 = vmatprep.subr.mxu0 0.0
    %379 = vmatpush1.msra.mxu0 0.0
    %380 = vmatprep.mubr.f32.mxu0 0.0
    %381 = vmatmul.mubr.f32.gmra.mrb[0].mxu0 %v314
    %v382 = vpop.f32.mrb[0].mxu0
    %v383 = vadd.f32 0.0, %v382
    %v384 = vpop.f32.mrb[0].mxu0
    %385 = vdwg.mxu0
    %v387 = vrot.slane %v383, 6
    %v389 = vadd.f32 %v204, %v387
    %v390 = vxor.u32 %v389, 2147483648
    %v391 = vmul.f32 %v390, 1.442695
    %v392 = vpow.pop %v391
    %v393 = vadd.f32 %v392, 1.0
    %v394 = vrcp.pop %v393
    %v395 = vmul.f32 1.0, %v394
    %v396 = vtanh.pop %v389
    %v398 = vrot.slane %v304, 6
    %v400 = vmul.f32 %v395, %v398
    %402 = vrot.lane.b32.xlu0 %v396, 64
    %v403 = vpop.permute.xlu0 %402
    %v405 = vmul.f32 %v395, %v403
    %407 = vrot.lane.b32.xlu0 %v405, 32
    %v408 = vpop.permute.xlu0 %407
    %v410 = vadd.f32 %v400, %v408
    %v411 = vtanh.pop %v410
    %413 = vrot.lane.b32.xlu0 %v411, 64
    %v414 = vpop.permute.xlu0 %413
    %v416 = vmul.f32 %v395, %v414
    %v418 = vrot.slane %v416, 2
    %419 = vrot.lane.b32.xlu0 %v418, 32
    %v420 = vpop.permute.xlu0 %419
    %v421 = vsel %vm212, %v420, 0
    %423 = vmatprep.subr.mxu0 0.0
    %424 = vmatpush1.msra.mxu0 %v119
    %425 = vmatprep.subr.mxu0 0.0
    %426 = vmatpush1.msra.mxu0 %v120
    %427 = vmatprep.subr.mxu0 0.0
    %428 = vmatpush1.msra.mxu0 %v121
    %429 = vmatprep.subr.mxu0 0.0
    %430 = vmatpush1.msra.mxu0 %v122
    %431 = vmatprep.subr.mxu0 0.0
    %432 = vmatpush1.msra.mxu0 0.0
    %433 = vmatprep.subr.mxu0 0.0
    %434 = vmatpush1.msra.mxu0 0.0
    %435 = vmatprep.subr.mxu0 0.0
    %436 = vmatpush1.msra.mxu0 0.0
    %437 = vmatprep.subr.mxu0 0.0
    %438 = vmatpush1.msra.mxu0 0.0
    %439 = vmatprep.subr.mxu0 0.0
    %440 = vmatpush1.msra.mxu0 0.0
    %441 = vmatprep.subr.mxu0 0.0
    %442 = vmatpush1.msra.mxu0 0.0
    %443 = vmatprep.subr.mxu0 0.0
    %444 = vmatpush1.msra.mxu0 0.0
    %445 = vmatprep.subr.mxu0 0.0
    %446 = vmatpush1.msra.mxu0 0.0
    %447 = vmatprep.subr.mxu0 0.0
    %448 = vmatpush1.msra.mxu0 0.0
    %449 = vmatprep.subr.mxu0 0.0
    %450 = vmatpush1.msra.mxu0 0.0
    %451 = vmatprep.subr.mxu0 0.0
    %452 = vmatpush1.msra.mxu0 0.0
    %453 = vmatprep.subr.mxu0 0.0
    %454 = vmatpush1.msra.mxu0 0.0
    %455 = vmatprep.subr.mxu0 0.0
    %456 = vmatpush1.msra.mxu0 0.0
    %457 = vmatprep.subr.mxu0 0.0
    %458 = vmatpush1.msra.mxu0 0.0
    %459 = vmatprep.subr.mxu0 0.0
    %460 = vmatpush1.msra.mxu0 0.0
    %461 = vmatprep.subr.mxu0 0.0
    %462 = vmatpush1.msra.mxu0 0.0
    %463 = vmatprep.subr.mxu0 0.0
    %464 = vmatpush1.msra.mxu0 0.0
    %465 = vmatprep.subr.mxu0 0.0
    %466 = vmatpush1.msra.mxu0 0.0
    %467 = vmatprep.subr.mxu0 0.0
    %468 = vmatpush1.msra.mxu0 0.0
    %469 = vmatprep.subr.mxu0 0.0
    %470 = vmatpush1.msra.mxu0 0.0
    %471 = vmatprep.subr.mxu0 0.0
    %472 = vmatpush1.msra.mxu0 0.0
    %473 = vmatprep.subr.mxu0 0.0
    %474 = vmatpush1.msra.mxu0 0.0
    %475 = vmatprep.subr.mxu0 0.0
    %476 = vmatpush1.msra.mxu0 0.0
    %477 = vmatprep.subr.mxu0 0.0
    %478 = vmatpush1.msra.mxu0 0.0
    %479 = vmatprep.subr.mxu0 0.0
    %480 = vmatpush1.msra.mxu0 0.0
    %481 = vmatprep.subr.mxu0 0.0
    %482 = vmatpush1.msra.mxu0 0.0
    %483 = vmatprep.subr.mxu0 0.0
    %484 = vmatpush1.msra.mxu0 0.0
    %485 = vmatprep.subr.mxu0 0.0
    %486 = vmatpush1.msra.mxu0 0.0
    %487 = vmatprep.mubr.f32.mxu0 0.0
    %488 = vmatmul.mubr.f32.gmra.mrb[0].mxu0 %v421
    %v489 = vpop.f32.mrb[0].mxu0
    %v490 = vadd.f32 0.0, %v489
    %v491 = vpop.f32.mrb[0].mxu0
    %492 = vdwg.mxu0
    %v494 = vrot.slane %v490, 4
    %v496 = vadd.f32 %v204, %v494
    %v497 = vxor.u32 %v496, 2147483648
    %v498 = vmul.f32 %v497, 1.442695
    %v499 = vpow.pop %v498
    %v500 = vadd.f32 %v499, 1.0
    %v501 = vrcp.pop %v500
    %v502 = vmul.f32 1.0, %v501
    %v503 = vtanh.pop %v496
    %v505 = vrot.slane %v410, 6
    %v507 = vmul.f32 %v502, %v505
    %509 = vrot.lane.b32.xlu0 %v503, 64
    %v510 = vpop.permute.xlu0 %509
    %v512 = vmul.f32 %v502, %v510
    %514 = vrot.lane.b32.xlu0 %v512, 32
    %v515 = vpop.permute.xlu0 %514
    %v517 = vadd.f32 %v507, %v515
    %v518 = vtanh.pop %v517
    %520 = vrot.lane.b32.xlu0 %v518, 64
    %v521 = vpop.permute.xlu0 %520
    %v523 = vmul.f32 %v502, %v521
    %v525 = vrot.slane %v523, 4
    %526 = vrot.lane.b32.xlu0 %v525, 32
    %v527 = vpop.permute.xlu0 %526
    %v528 = vsel %vm212, %v527, 0
    %530 = vmatprep.subr.mxu0 0.0
    %531 = vmatpush1.msra.mxu0 %v119
    %532 = vmatprep.subr.mxu0 0.0
    %533 = vmatpush1.msra.mxu0 %v120
    %534 = vmatprep.subr.mxu0 0.0
    %535 = vmatpush1.msra.mxu0 %v121
    %536 = vmatprep.subr.mxu0 0.0
    %537 = vmatpush1.msra.mxu0 %v122
    %538 = vmatprep.subr.mxu0 0.0
    %539 = vmatpush1.msra.mxu0 0.0
    %540 = vmatprep.subr.mxu0 0.0
    %541 = vmatpush1.msra.mxu0 0.0
    %542 = vmatprep.subr.mxu0 0.0
    %543 = vmatpush1.msra.mxu0 0.0
    %544 = vmatprep.subr.mxu0 0.0
    %545 = vmatpush1.msra.mxu0 0.0
    %546 = vmatprep.subr.mxu0 0.0
    %547 = vmatpush1.msra.mxu0 0.0
    %548 = vmatprep.subr.mxu0 0.0
    %549 = vmatpush1.msra.mxu0 0.0
    %550 = vmatprep.subr.mxu0 0.0
    %551 = vmatpush1.msra.mxu0 0.0
    %552 = vmatprep.subr.mxu0 0.0
    %553 = vmatpush1.msra.mxu0 0.0
    %554 = vmatprep.subr.mxu0 0.0
    %555 = vmatpush1.msra.mxu0 0.0
    %556 = vmatprep.subr.mxu0 0.0
    %557 = vmatpush1.msra.mxu0 0.0
    %558 = vmatprep.subr.mxu0 0.0
    %559 = vmatpush1.msra.mxu0 0.0
    %560 = vmatprep.subr.mxu0 0.0
    %561 = vmatpush1.msra.mxu0 0.0
    %562 = vmatprep.subr.mxu0 0.0
    %563 = vmatpush1.msra.mxu0 0.0
    %564 = vmatprep.subr.mxu0 0.0
    %565 = vmatpush1.msra.mxu0 0.0
    %566 = vmatprep.subr.mxu0 0.0
    %567 = vmatpush1.msra.mxu0 0.0
    %568 = vmatprep.subr.mxu0 0.0
    %569 = vmatpush1.msra.mxu0 0.0
    %570 = vmatprep.subr.mxu0 0.0
    %571 = vmatpush1.msra.mxu0 0.0
    %572 = vmatprep.subr.mxu0 0.0
    %573 = vmatpush1.msra.mxu0 0.0
    %574 = vmatprep.subr.mxu0 0.0
    %575 = vmatpush1.msra.mxu0 0.0
    %576 = vmatprep.subr.mxu0 0.0
    %577 = vmatpush1.msra.mxu0 0.0
    %578 = vmatprep.subr.mxu0 0.0
    %579 = vmatpush1.msra.mxu0 0.0
    %580 = vmatprep.subr.mxu0 0.0
    %581 = vmatpush1.msra.mxu0 0.0
    %582 = vmatprep.subr.mxu0 0.0
    %583 = vmatpush1.msra.mxu0 0.0
    %584 = vmatprep.subr.mxu0 0.0
    %585 = vmatpush1.msra.mxu0 0.0
    %586 = vmatprep.subr.mxu0 0.0
    %587 = vmatpush1.msra.mxu0 0.0
    %588 = vmatprep.subr.mxu0 0.0
    %589 = vmatpush1.msra.mxu0 0.0
    %590 = vmatprep.subr.mxu0 0.0
    %591 = vmatpush1.msra.mxu0 0.0
    %592 = vmatprep.subr.mxu0 0.0
    %593 = vmatpush1.msra.mxu0 0.0
    %594 = vmatprep.mubr.f32.mxu0 0.0
    %595 = vmatmul.mubr.f32.gmra.mrb[0].mxu0 %v528
    %v596 = vpop.f32.mrb[0].mxu0
    %v597 = vadd.f32 0.0, %v596
    %v598 = vpop.f32.mrb[0].mxu0
    %599 = vdwg.mxu0
    %v601 = vrot.slane %v597, 2
    %v603 = vadd.f32 %v204, %v601
    %v604 = vxor.u32 %v603, 2147483648
    %v605 = vmul.f32 %v604, 1.442695
    %v606 = vpow.pop %v605
    %v607 = vadd.f32 %v606, 1.0
    %v608 = vrcp.pop %v607
    %v609 = vmul.f32 1.0, %v608
    %v610 = vtanh.pop %v603
    %v612 = vrot.slane %v517, 6
    %v614 = vmul.f32 %v609, %v612
    %616 = vrot.lane.b32.xlu0 %v610, 64
    %v617 = vpop.permute.xlu0 %616
    %v619 = vmul.f32 %v609, %v617
    %621 = vrot.lane.b32.xlu0 %v619, 32
    %v622 = vpop.permute.xlu0 %621
    %v624 = vadd.f32 %v614, %v622
    %v625 = vtanh.pop %v624
    %627 = vrot.lane.b32.xlu0 %v625, 64
    %v628 = vpop.permute.xlu0 %627
    %v630 = vmul.f32 %v609, %v628
    %v632 = vrot.slane %v630, 6
    %633 = vrot.lane.b32.xlu0 %v632, 32
    %v634 = vpop.permute.xlu0 %633
    %v635 = vsel %vm212, %v634, 0
    %637 = vmatprep.subr.mxu0 0.0
    %638 = vmatpush1.msra.mxu0 %v119
    %639 = vmatprep.subr.mxu0 0.0
    %640 = vmatpush1.msra.mxu0 %v120
    %641 = vmatprep.subr.mxu0 0.0
    %642 = vmatpush1.msra.mxu0 %v121
    %643 = vmatprep.subr.mxu0 0.0
    %644 = vmatpush1.msra.mxu0 %v122
    %645 = vmatprep.subr.mxu0 0.0
    %646 = vmatpush1.msra.mxu0 0.0
    %647 = vmatprep.subr.mxu0 0.0
    %648 = vmatpush1.msra.mxu0 0.0
    %649 = vmatprep.subr.mxu0 0.0
    %650 = vmatpush1.msra.mxu0 0.0
    %651 = vmatprep.subr.mxu0 0.0
    %652 = vmatpush1.msra.mxu0 0.0
    %653 = vmatprep.subr.mxu0 0.0
    %654 = vmatpush1.msra.mxu0 0.0
    %655 = vmatprep.subr.mxu0 0.0
    %656 = vmatpush1.msra.mxu0 0.0
    %657 = vmatprep.subr.mxu0 0.0
    %658 = vmatpush1.msra.mxu0 0.0
    %659 = vmatprep.subr.mxu0 0.0
    %660 = vmatpush1.msra.mxu0 0.0
    %661 = vmatprep.subr.mxu0 0.0
    %662 = vmatpush1.msra.mxu0 0.0
    %663 = vmatprep.subr.mxu0 0.0
    %664 = vmatpush1.msra.mxu0 0.0
    %665 = vmatprep.subr.mxu0 0.0
    %666 = vmatpush1.msra.mxu0 0.0
    %667 = vmatprep.subr.mxu0 0.0
    %668 = vmatpush1.msra.mxu0 0.0
    %669 = vmatprep.subr.mxu0 0.0
    %670 = vmatpush1.msra.mxu0 0.0
    %671 = vmatprep.subr.mxu0 0.0
    %672 = vmatpush1.msra.mxu0 0.0
    %673 = vmatprep.subr.mxu0 0.0
    %674 = vmatpush1.msra.mxu0 0.0
    %675 = vmatprep.subr.mxu0 0.0
    %676 = vmatpush1.msra.mxu0 0.0
    %677 = vmatprep.subr.mxu0 0.0
    %678 = vmatpush1.msra.mxu0 0.0
    %679 = vmatprep.subr.mxu0 0.0
    %680 = vmatpush1.msra.mxu0 0.0
    %681 = vmatprep.subr.mxu0 0.0
    %682 = vmatpush1.msra.mxu0 0.0
    %683 = vmatprep.subr.mxu0 0.0
    %684 = vmatpush1.msra.mxu0 0.0
    %685 = vmatprep.subr.mxu0 0.0
    %686 = vmatpush1.msra.mxu0 0.0
    %687 = vmatprep.subr.mxu0 0.0
    %688 = vmatpush1.msra.mxu0 0.0
    %689 = vmatprep.subr.mxu0 0.0
    %690 = vmatpush1.msra.mxu0 0.0
    %691 = vmatprep.subr.mxu0 0.0
    %692 = vmatpush1.msra.mxu0 0.0
    %693 = vmatprep.subr.mxu0 0.0
    %694 = vmatpush1.msra.mxu0 0.0
    %695 = vmatprep.subr.mxu0 0.0
    %696 = vmatpush1.msra.mxu0 0.0
    %697 = vmatprep.subr.mxu0 0.0
    %698 = vmatpush1.msra.mxu0 0.0
    %699 = vmatprep.subr.mxu0 0.0
    %700 = vmatpush1.msra.mxu0 0.0
    %701 = vmatprep.mubr.f32.mxu0 0.0
    %702 = vmatmul.mubr.f32.gmra.mrb[0].mxu0 %v635
    %v703 = vpop.f32.mrb[0].mxu0
    %v704 = vadd.f32 0.0, %v703
    %v705 = vpop.f32.mrb[0].mxu0
    %706 = vdwg.mxu0
    %v707 = vadd.f32 %v209, %v704
    %v708 = vxor.u32 %v707, 2147483648
    %v709 = vmul.f32 %v708, 1.442695
    %v710 = vpow.pop %v709
    %v711 = vadd.f32 %v710, 1.0
    %v712 = vrcp.pop %v711
    %v713 = vmul.f32 1.0, %v712
    %v714 = vtanh.pop %v707
    %v716 = vrot.slane %v624, 6
    %v718 = vmul.f32 %v713, %v716
    %720 = vrot.lane.b32.xlu0 %v714, 64
    %v721 = vpop.permute.xlu0 %720
    %v723 = vmul.f32 %v713, %v721
    %725 = vrot.lane.b32.xlu0 %v723, 32
    %v726 = vpop.permute.xlu0 %725
    %v728 = vadd.f32 %v718, %v726
    %v729 = vtanh.pop %v728
    %731 = vrot.lane.b32.xlu0 %v729, 64
    %v732 = vpop.permute.xlu0 %731
    %v734 = vmul.f32 %v713, %v732
    %736 = vrot.lane.b32.xlu0 %v734, 32
    %v737 = vpop.permute.xlu0 %736
    %v738 = vsel %vm212, %v737, 0
    %740 = vmatprep.subr.mxu0 0.0
    %741 = vmatpush1.msra.mxu0 %v119
    %742 = vmatprep.subr.mxu0 0.0
    %743 = vmatpush1.msra.mxu0 %v120
    %744 = vmatprep.subr.mxu0 0.0
    %745 = vmatpush1.msra.mxu0 %v121
    %746 = vmatprep.subr.mxu0 0.0
    %747 = vmatpush1.msra.mxu0 %v122
    %748 = vmatprep.subr.mxu0 0.0
    %749 = vmatpush1.msra.mxu0 0.0
    %750 = vmatprep.subr.mxu0 0.0
    %751 = vmatpush1.msra.mxu0 0.0
    %752 = vmatprep.subr.mxu0 0.0
    %753 = vmatpush1.msra.mxu0 0.0
    %754 = vmatprep.subr.mxu0 0.0
    %755 = vmatpush1.msra.mxu0 0.0
    %756 = vmatprep.subr.mxu0 0.0
    %757 = vmatpush1.msra.mxu0 0.0
    %758 = vmatprep.subr.mxu0 0.0
    %759 = vmatpush1.msra.mxu0 0.0
    %760 = vmatprep.subr.mxu0 0.0
    %761 = vmatpush1.msra.mxu0 0.0
    %762 = vmatprep.subr.mxu0 0.0
    %763 = vmatpush1.msra.mxu0 0.0
    %764 = vmatprep.subr.mxu0 0.0
    %765 = vmatpush1.msra.mxu0 0.0
    %766 = vmatprep.subr.mxu0 0.0
    %767 = vmatpush1.msra.mxu0 0.0
    %768 = vmatprep.subr.mxu0 0.0
    %769 = vmatpush1.msra.mxu0 0.0
    %770 = vmatprep.subr.mxu0 0.0
    %771 = vmatpush1.msra.mxu0 0.0
    %772 = vmatprep.subr.mxu0 0.0
    %773 = vmatpush1.msra.mxu0 0.0
    %774 = vmatprep.subr.mxu0 0.0
    %775 = vmatpush1.msra.mxu0 0.0
    %776 = vmatprep.subr.mxu0 0.0
    %777 = vmatpush1.msra.mxu0 0.0
    %778 = vmatprep.subr.mxu0 0.0
    %779 = vmatpush1.msra.mxu0 0.0
    %780 = vmatprep.subr.mxu0 0.0
    %781 = vmatpush1.msra.mxu0 0.0
    %782 = vmatprep.subr.mxu0 0.0
    %783 = vmatpush1.msra.mxu0 0.0
    %784 = vmatprep.subr.mxu0 0.0
    %785 = vmatpush1.msra.mxu0 0.0
    %786 = vmatprep.subr.mxu0 0.0
    %787 = vmatpush1.msra.mxu0 0.0
    %788 = vmatprep.subr.mxu0 0.0
    %789 = vmatpush1.msra.mxu0 0.0
    %790 = vmatprep.subr.mxu0 0.0
    %791 = vmatpush1.msra.mxu0 0.0
    %792 = vmatprep.subr.mxu0 0.0
    %793 = vmatpush1.msra.mxu0 0.0
    %794 = vmatprep.subr.mxu0 0.0
    %795 = vmatpush1.msra.mxu0 0.0
    %796 = vmatprep.subr.mxu0 0.0
    %797 = vmatpush1.msra.mxu0 0.0
    %798 = vmatprep.subr.mxu0 0.0
    %799 = vmatpush1.msra.mxu0 0.0
    %800 = vmatprep.subr.mxu0 0.0
    %801 = vmatpush1.msra.mxu0 0.0
    %802 = vmatprep.subr.mxu0 0.0
    %803 = vmatpush1.msra.mxu0 0.0
    %804 = vmatprep.mubr.f32.mxu0 0.0
    %805 = vmatmul.mubr.f32.gmra.mrb[0].mxu0 %v738
    %v806 = vpop.f32.mrb[0].mxu0
    %v807 = vadd.f32 0.0, %v806
    %v808 = vpop.f32.mrb[0].mxu0
    %809 = vdwg.mxu0
    %v811 = vrot.slane %v807, 6
    %v813 = vadd.f32 %v209, %v811
    %v814 = vxor.u32 %v813, 2147483648
    %v815 = vmul.f32 %v814, 1.442695
    %v816 = vpow.pop %v815
    %v817 = vadd.f32 %v816, 1.0
    %v818 = vrcp.pop %v817
    %v819 = vmul.f32 1.0, %v818
    %v820 = vtanh.pop %v813
    %v822 = vrot.slane %v728, 6
    %v824 = vmul.f32 %v819, %v822
    %826 = vrot.lane.b32.xlu0 %v820, 64
    %v827 = vpop.permute.xlu0 %826
    %v829 = vmul.f32 %v819, %v827
    %831 = vrot.lane.b32.xlu0 %v829, 32
    %v832 = vpop.permute.xlu0 %831
    %v834 = vadd.f32 %v824, %v832
    %v835 = vtanh.pop %v834
    %837 = vrot.lane.b32.xlu0 %v835, 64
    %v838 = vpop.permute.xlu0 %837
    %v840 = vmul.f32 %v819, %v838
    %v842 = vrot.slane %v840, 2
    %843 = vrot.lane.b32.xlu0 %v842, 32
    %v844 = vpop.permute.xlu0 %843
    %v845 = vsel %vm212, %v844, 0
    %847 = vmatprep.subr.mxu0 0.0
    %848 = vmatpush1.msra.mxu0 %v119
    %849 = vmatprep.subr.mxu0 0.0
    %850 = vmatpush1.msra.mxu0 %v120
    %851 = vmatprep.subr.mxu0 0.0
    %852 = vmatpush1.msra.mxu0 %v121
    %853 = vmatprep.subr.mxu0 0.0
    %854 = vmatpush1.msra.mxu0 %v122
    %855 = vmatprep.subr.mxu0 0.0
    %856 = vmatpush1.msra.mxu0 0.0
    %857 = vmatprep.subr.mxu0 0.0
    %858 = vmatpush1.msra.mxu0 0.0
    %859 = vmatprep.subr.mxu0 0.0
    %860 = vmatpush1.msra.mxu0 0.0
    %861 = vmatprep.subr.mxu0 0.0
    %862 = vmatpush1.msra.mxu0 0.0
    %863 = vmatprep.subr.mxu0 0.0
    %864 = vmatpush1.msra.mxu0 0.0
    %865 = vmatprep.subr.mxu0 0.0
    %866 = vmatpush1.msra.mxu0 0.0
    %867 = vmatprep.subr.mxu0 0.0
    %868 = vmatpush1.msra.mxu0 0.0
    %869 = vmatprep.subr.mxu0 0.0
    %870 = vmatpush1.msra.mxu0 0.0
    %871 = vmatprep.subr.mxu0 0.0
    %872 = vmatpush1.msra.mxu0 0.0
    %873 = vmatprep.subr.mxu0 0.0
    %874 = vmatpush1.msra.mxu0 0.0
    %875 = vmatprep.subr.mxu0 0.0
    %876 = vmatpush1.msra.mxu0 0.0
    %877 = vmatprep.subr.mxu0 0.0
    %878 = vmatpush1.msra.mxu0 0.0
    %879 = vmatprep.subr.mxu0 0.0
    %880 = vmatpush1.msra.mxu0 0.0
    %881 = vmatprep.subr.mxu0 0.0
    %882 = vmatpush1.msra.mxu0 0.0
    %883 = vmatprep.subr.mxu0 0.0
    %884 = vmatpush1.msra.mxu0 0.0
    %885 = vmatprep.subr.mxu0 0.0
    %886 = vmatpush1.msra.mxu0 0.0
    %887 = vmatprep.subr.mxu0 0.0
    %888 = vmatpush1.msra.mxu0 0.0
    %889 = vmatprep.subr.mxu0 0.0
    %890 = vmatpush1.msra.mxu0 0.0
    %891 = vmatprep.subr.mxu0 0.0
    %892 = vmatpush1.msra.mxu0 0.0
    %893 = vmatprep.subr.mxu0 0.0
    %894 = vmatpush1.msra.mxu0 0.0
    %895 = vmatprep.subr.mxu0 0.0
    %896 = vmatpush1.msra.mxu0 0.0
    %897 = vmatprep.subr.mxu0 0.0
    %898 = vmatpush1.msra.mxu0 0.0
    %899 = vmatprep.subr.mxu0 0.0
    %900 = vmatpush1.msra.mxu0 0.0
    %901 = vmatprep.subr.mxu0 0.0
    %902 = vmatpush1.msra.mxu0 0.0
    %903 = vmatprep.subr.mxu0 0.0
    %904 = vmatpush1.msra.mxu0 0.0
    %905 = vmatprep.subr.mxu0 0.0
    %906 = vmatpush1.msra.mxu0 0.0
    %907 = vmatprep.subr.mxu0 0.0
    %908 = vmatpush1.msra.mxu0 0.0
    %909 = vmatprep.subr.mxu0 0.0
    %910 = vmatpush1.msra.mxu0 0.0
    %911 = vmatprep.mubr.f32.mxu0 0.0
    %912 = vmatmul.mubr.f32.gmra.mrb[0].mxu0 %v845
    %v913 = vpop.f32.mrb[0].mxu0
    %v914 = vadd.f32 0.0, %v913
    %v915 = vpop.f32.mrb[0].mxu0
    %916 = vdwg.mxu0
    %v918 = vrot.slane %v914, 4
    %v920 = vadd.f32 %v209, %v918
    %v921 = vxor.u32 %v920, 2147483648
    %v922 = vmul.f32 %v921, 1.442695
    %v923 = vpow.pop %v922
    %v924 = vadd.f32 %v923, 1.0
    %v925 = vrcp.pop %v924
    %v926 = vmul.f32 1.0, %v925
    %v927 = vtanh.pop %v920
    %v929 = vrot.slane %v834, 6
    %v931 = vmul.f32 %v926, %v929
    %933 = vrot.lane.b32.xlu0 %v927, 64
    %v934 = vpop.permute.xlu0 %933
    %v936 = vmul.f32 %v926, %v934
    %938 = vrot.lane.b32.xlu0 %v936, 32
    %v939 = vpop.permute.xlu0 %938
    %v941 = vadd.f32 %v931, %v939
    %v942 = vtanh.pop %v941
    %944 = vrot.lane.b32.xlu0 %v942, 64
    %v945 = vpop.permute.xlu0 %944
    %v947 = vmul.f32 %v926, %v945
    %v949 = vrot.slane %v947, 4
    %950 = vrot.lane.b32.xlu0 %v949, 32
    %v951 = vpop.permute.xlu0 %950
    %v952 = vsel %vm212, %v951, 0
    %954 = vmatprep.subr.mxu0 0.0
    %955 = vmatpush1.msra.mxu0 %v119
    %956 = vmatprep.subr.mxu0 0.0
    %957 = vmatpush1.msra.mxu0 %v120
    %958 = vmatprep.subr.mxu0 0.0
    %959 = vmatpush1.msra.mxu0 %v121
    %960 = vmatprep.subr.mxu0 0.0
    %961 = vmatpush1.msra.mxu0 %v122
    %962 = vmatprep.subr.mxu0 0.0
    %963 = vmatpush1.msra.mxu0 0.0
    %964 = vmatprep.subr.mxu0 0.0
    %965 = vmatpush1.msra.mxu0 0.0
    %966 = vmatprep.subr.mxu0 0.0
    %967 = vmatpush1.msra.mxu0 0.0
    %968 = vmatprep.subr.mxu0 0.0
    %969 = vmatpush1.msra.mxu0 0.0
    %970 = vmatprep.subr.mxu0 0.0
    %971 = vmatpush1.msra.mxu0 0.0
    %972 = vmatprep.subr.mxu0 0.0
    %973 = vmatpush1.msra.mxu0 0.0
    %974 = vmatprep.subr.mxu0 0.0
    %975 = vmatpush1.msra.mxu0 0.0
    %976 = vmatprep.subr.mxu0 0.0
    %977 = vmatpush1.msra.mxu0 0.0
    %978 = vmatprep.subr.mxu0 0.0
    %979 = vmatpush1.msra.mxu0 0.0
    %980 = vmatprep.subr.mxu0 0.0
    %981 = vmatpush1.msra.mxu0 0.0
    %982 = vmatprep.subr.mxu0 0.0
    %983 = vmatpush1.msra.mxu0 0.0
    %984 = vmatprep.subr.mxu0 0.0
    %985 = vmatpush1.msra.mxu0 0.0
    %986 = vmatprep.subr.mxu0 0.0
    %987 = vmatpush1.msra.mxu0 0.0
    %988 = vmatprep.subr.mxu0 0.0
    %989 = vmatpush1.msra.mxu0 0.0
    %990 = vmatprep.subr.mxu0 0.0
    %991 = vmatpush1.msra.mxu0 0.0
    %992 = vmatprep.subr.mxu0 0.0
    %993 = vmatpush1.msra.mxu0 0.0
    %994 = vmatprep.subr.mxu0 0.0
    %995 = vmatpush1.msra.mxu0 0.0
    %996 = vmatprep.subr.mxu0 0.0
    %997 = vmatpush1.msra.mxu0 0.0
    %998 = vmatprep.subr.mxu0 0.0
    %999 = vmatpush1.msra.mxu0 0.0
    %1000 = vmatprep.subr.mxu0 0.0
    %1001 = vmatpush1.msra.mxu0 0.0
    %1002 = vmatprep.subr.mxu0 0.0
    %1003 = vmatpush1.msra.mxu0 0.0
    %1004 = vmatprep.subr.mxu0 0.0
    %1005 = vmatpush1.msra.mxu0 0.0
    %1006 = vmatprep.subr.mxu0 0.0
    %1007 = vmatpush1.msra.mxu0 0.0
    %1008 = vmatprep.subr.mxu0 0.0
    %1009 = vmatpush1.msra.mxu0 0.0
    %1010 = vmatprep.subr.mxu0 0.0
    %1011 = vmatpush1.msra.mxu0 0.0
    %1012 = vmatprep.subr.mxu0 0.0
    %1013 = vmatpush1.msra.mxu0 0.0
    %1014 = vmatprep.subr.mxu0 0.0
    %1015 = vmatpush1.msra.mxu0 0.0
    %1016 = vmatprep.subr.mxu0 0.0
    %1017 = vmatpush1.msra.mxu0 0.0
    %1018 = vmatprep.mubr.f32.mxu0 0.0
    %1019 = vmatmul.mubr.f32.gmra.mrb[0].mxu0 %v952
    %v1020 = vpop.f32.mrb[0].mxu0
    %v1021 = vadd.f32 0.0, %v1020
    %v1022 = vpop.f32.mrb[0].mxu0
    %1023 = vdwg.mxu0
    %v1025 = vrot.slane %v1021, 2
    %v1027 = vadd.f32 %v209, %v1025
    %v1028 = vxor.u32 %v1027, 2147483648
    %v1029 = vmul.f32 %v1028, 1.442695
    %v1030 = vpow.pop %v1029
    %v1031 = vadd.f32 %v1030, 1.0
    %v1032 = vrcp.pop %v1031
    %v1033 = vmul.f32 1.0, %v1032
    %v1034 = vtanh.pop %v1027
    %v1036 = vrot.slane %v941, 6
    %v1038 = vmul.f32 %v1033, %v1036
    %1040 = vrot.lane.b32.xlu0 %v1034, 64
    %v1041 = vpop.permute.xlu0 %1040
    %v1043 = vmul.f32 %v1033, %v1041
    %1045 = vrot.lane.b32.xlu0 %v1043, 32
    %v1046 = vpop.permute.xlu0 %1045
    %v1048 = vadd.f32 %v1038, %v1046
    %v1049 = vtanh.pop %v1048
    %1051 = vrot.lane.b32.xlu0 %v1049, 64
    %v1052 = vpop.permute.xlu0 %1051
    %v1054 = vmul.f32 %v1033, %v1052
    %vm1055 = vcmask 1041408
    %v1056 = vsel %vm1055, %v310, %v416
    %vm1057 = vcmask 1043456
    %v1058 = vsel %vm1057, %v1056, %v523
    %vm1059 = vcmask 1045504
    %v1060 = vsel %vm1059, %v1058, %v630
    %v1061 = vsel %vm1055, %v734, %v840
    %v1062 = vsel %vm1057, %v1061, %v947
    %v1063 = vsel %vm1059, %v1062, %v1054
    %v1064 = vld [vmem:[%s4] sm:$0xff]
    %v1065 = vld [vmem:[%s4 + $0x8] sm:$0xff]
    %v1066 = vld [vmem:[%s4 + $0x10] sm:$0xff]
    %v1067 = vld [vmem:[%s4 + $0x18] sm:$0xff]
    %v1068 = vld [vmem:[#allocation9] sm:$0xff]
    %v1069 = vld [vmem:[#allocation9 + $0x8] sm:$0xff]
    %v1070 = vld [vmem:[#allocation9 + $0x10] sm:$0xff]
    %v1071 = vld [vmem:[#allocation9 + $0x18] sm:$0xff]
    %v1072 = vld [vmem:[%s6] sm:$0x1]
    %v1074 = vlaneseq
    %v1075 = vshrl.u32 %v1074, 7
    %v1076 = vsub.s32 0, %v1075
    %v1077 = vrot.slane %v1072, %v1076
    %1081 = vrot.lane.b32.xlu0 %v1060, 32
    %v1082 = vpop.permute.xlu0 %1081
    %1083 = vrot.lane.b32.xlu0 %v1063, 32
    %v1084 = vpop.permute.xlu0 %1083
    %v1085 = vsel %vm212, %v1082, 0
    %v1087 = vsel %vm212, %v1084, 0
    %1089 = vmatprep.subr.mxu0 0.0
    %1090 = vmatpush1.msra.mxu0 %v1064
    %1091 = vmatprep.subr.mxu0 0.0
    %1092 = vmatpush1.msra.mxu0 %v1065
    %1093 = vmatprep.subr.mxu0 0.0
    %1094 = vmatpush1.msra.mxu0 %v1066
    %1095 = vmatprep.subr.mxu0 0.0
    %1096 = vmatpush1.msra.mxu0 %v1067
    %1097 = vmatprep.subr.mxu0 0.0
    %1098 = vmatpush1.msra.mxu0 0.0
    %1099 = vmatprep.subr.mxu0 0.0
    %1100 = vmatpush1.msra.mxu0 0.0
    %1101 = vmatprep.subr.mxu0 0.0
    %1102 = vmatpush1.msra.mxu0 0.0
    %1103 = vmatprep.subr.mxu0 0.0
    %1104 = vmatpush1.msra.mxu0 0.0
    %1105 = vmatprep.subr.mxu0 0.0
    %1106 = vmatpush1.msra.mxu0 0.0
    %1107 = vmatprep.subr.mxu0 0.0
    %1108 = vmatpush1.msra.mxu0 0.0
    %1109 = vmatprep.subr.mxu0 0.0
    %1110 = vmatpush1.msra.mxu0 0.0
    %1111 = vmatprep.subr.mxu0 0.0
    %1112 = vmatpush1.msra.mxu0 0.0
    %1113 = vmatprep.subr.mxu0 0.0
    %1114 = vmatpush1.msra.mxu0 0.0
    %1115 = vmatprep.subr.mxu0 0.0
    %1116 = vmatpush1.msra.mxu0 0.0
    %1117 = vmatprep.subr.mxu0 0.0
    %1118 = vmatpush1.msra.mxu0 0.0
    %1119 = vmatprep.subr.mxu0 0.0
    %1120 = vmatpush1.msra.mxu0 0.0
    %1121 = vmatprep.subr.mxu0 0.0
    %1122 = vmatpush1.msra.mxu0 0.0
    %1123 = vmatprep.subr.mxu0 0.0
    %1124 = vmatpush1.msra.mxu0 0.0
    %1125 = vmatprep.subr.mxu0 0.0
    %1126 = vmatpush1.msra.mxu0 0.0
    %1127 = vmatprep.subr.mxu0 0.0
    %1128 = vmatpush1.msra.mxu0 0.0
    %1129 = vmatprep.subr.mxu0 0.0
    %1130 = vmatpush1.msra.mxu0 0.0
    %1131 = vmatprep.subr.mxu0 0.0
    %1132 = vmatpush1.msra.mxu0 0.0
    %1133 = vmatprep.subr.mxu0 0.0
    %1134 = vmatpush1.msra.mxu0 0.0
    %1135 = vmatprep.subr.mxu0 0.0
    %1136 = vmatpush1.msra.mxu0 0.0
    %1137 = vmatprep.subr.mxu0 0.0
    %1138 = vmatpush1.msra.mxu0 0.0
    %1139 = vmatprep.subr.mxu0 0.0
    %1140 = vmatpush1.msra.mxu0 0.0
    %1141 = vmatprep.subr.mxu0 0.0
    %1142 = vmatpush1.msra.mxu0 0.0
    %1143 = vmatprep.subr.mxu0 0.0
    %1144 = vmatpush1.msra.mxu0 0.0
    %1145 = vmatprep.subr.mxu0 0.0
    %1146 = vmatpush1.msra.mxu0 0.0
    %1147 = vmatprep.subr.mxu0 0.0
    %1148 = vmatpush1.msra.mxu0 0.0
    %1149 = vmatprep.subr.mxu0 0.0
    %1150 = vmatpush1.msra.mxu0 0.0
    %1151 = vmatprep.subr.mxu0 0.0
    %1152 = vmatpush1.msra.mxu0 0.0
    %1153 = vmatprep.mubr.f32.mxu0 0.0
    %1154 = vmatmul.mubr.f32.gmra.mrb[0].mxu0 %v1085
    %v1155 = vpop.f32.mrb[0].mxu0
    %v1156 = vadd.f32 %v1077, %v1155
    %v1157 = vpop.f32.mrb[0].mxu0
    %1158 = vmatprep.mubr.f32.mxu0 0.0
    %1159 = vmatmul.mubr.f32.gmra.mrb[0].mxu0 %v1087
    %v1160 = vpop.f32.mrb[0].mxu0
    %v1161 = vadd.f32 %v1077, %v1160
    %v1162 = vpop.f32.mrb[0].mxu0
    %1163 = vdwg.mxu0
    %1164 = vmatprep.subr.mxu0 0.0
    %1165 = vmatpush1.msra.mxu0 %v1068
    %1166 = vmatprep.subr.mxu0 0.0
    %1167 = vmatpush1.msra.mxu0 %v1069
    %1168 = vmatprep.subr.mxu0 0.0
    %1169 = vmatpush1.msra.mxu0 %v1070
    %1170 = vmatprep.subr.mxu0 0.0
    %1171 = vmatpush1.msra.mxu0 %v1071
    %1172 = vmatprep.subr.mxu0 0.0
    %1173 = vmatpush1.msra.mxu0 0.0
    %1174 = vmatprep.subr.mxu0 0.0
    %1175 = vmatpush1.msra.mxu0 0.0
    %1176 = vmatprep.subr.mxu0 0.0
    %1177 = vmatpush1.msra.mxu0 0.0
    %1178 = vmatprep.subr.mxu0 0.0
    %1179 = vmatpush1.msra.mxu0 0.0
    %1180 = vmatprep.subr.mxu0 0.0
    %1181 = vmatpush1.msra.mxu0 0.0
    %1182 = vmatprep.subr.mxu0 0.0
    %1183 = vmatpush1.msra.mxu0 0.0
    %1184 = vmatprep.subr.mxu0 0.0
    %1185 = vmatpush1.msra.mxu0 0.0
    %1186 = vmatprep.subr.mxu0 0.0
    %1187 = vmatpush1.msra.mxu0 0.0
    %1188 = vmatprep.subr.mxu0 0.0
    %1189 = vmatpush1.msra.mxu0 0.0
    %1190 = vmatprep.subr.mxu0 0.0
    %1191 = vmatpush1.msra.mxu0 0.0
    %1192 = vmatprep.subr.mxu0 0.0
    %1193 = vmatpush1.msra.mxu0 0.0
    %1194 = vmatprep.subr.mxu0 0.0
    %1195 = vmatpush1.msra.mxu0 0.0
    %1196 = vmatprep.subr.mxu0 0.0
    %1197 = vmatpush1.msra.mxu0 0.0
    %1198 = vmatprep.subr.mxu0 0.0
    %1199 = vmatpush1.msra.mxu0 0.0
    %1200 = vmatprep.subr.mxu0 0.0
    %1201 = vmatpush1.msra.mxu0 0.0
    %1202 = vmatprep.subr.mxu0 0.0
    %1203 = vmatpush1.msra.mxu0 0.0
    %1204 = vmatprep.subr.mxu0 0.0
    %1205 = vmatpush1.msra.mxu0 0.0
    %1206 = vmatprep.subr.mxu0 0.0
    %1207 = vmatpush1.msra.mxu0 0.0
    %1208 = vmatprep.subr.mxu0 0.0
    %1209 = vmatpush1.msra.mxu0 0.0
    %1210 = vmatprep.subr.mxu0 0.0
    %1211 = vmatpush1.msra.mxu0 0.0
    %1212 = vmatprep.subr.mxu0 0.0
    %1213 = vmatpush1.msra.mxu0 0.0
    %1214 = vmatprep.subr.mxu0 0.0
    %1215 = vmatpush1.msra.mxu0 0.0
    %1216 = vmatprep.subr.mxu0 0.0
    %1217 = vmatpush1.msra.mxu0 0.0
    %1218 = vmatprep.subr.mxu0 0.0
    %1219 = vmatpush1.msra.mxu0 0.0
    %1220 = vmatprep.subr.mxu0 0.0
    %1221 = vmatpush1.msra.mxu0 0.0
    %1222 = vmatprep.subr.mxu0 0.0
    %1223 = vmatpush1.msra.mxu0 0.0
    %1224 = vmatprep.subr.mxu0 0.0
    %1225 = vmatpush1.msra.mxu0 0.0
    %1226 = vmatprep.subr.mxu0 0.0
    %1227 = vmatpush1.msra.mxu0 0.0
    %1228 = vmatprep.mubr.f32.mxu0 0.0
    %1229 = vmatmul.mubr.f32.gmra.mrb[0].mxu0 %v214
    %v1230 = vpop.f32.mrb[0].mxu0
    %v1231 = vadd.f32 0.0, %v1230
    %v1232 = vpop.f32.mrb[0].mxu0
    %1233 = vdwg.mxu0
    %v1234 = vadd.f32 %v1156, %v1231
    %v1235 = vxor.u32 %v1234, 2147483648
    %v1236 = vmul.f32 %v1235, 1.442695
    %v1237 = vpow.pop %v1236
    %v1238 = vadd.f32 %v1237, 1.0
    %v1239 = vrcp.pop %v1238
    %v1240 = vmul.f32 1.0, %v1239
    %v1241 = vtanh.pop %v1234
    %v1242 = vmul.f32 %v1240, 0.0
    %1244 = vrot.lane.b32.xlu0 %v1241, 64
    %v1245 = vpop.permute.xlu0 %1244
    %v1247 = vmul.f32 %v1240, %v1245
    %1249 = vrot.lane.b32.xlu0 %v1247, 32
    %v1250 = vpop.permute.xlu0 %1249
    %v1252 = vadd.f32 %v1242, %v1250
    %v1253 = vtanh.pop %v1252
    %1255 = vrot.lane.b32.xlu0 %v1253, 64
    %v1256 = vpop.permute.xlu0 %1255
    %v1258 = vmul.f32 %v1240, %v1256
    %1260 = vrot.lane.b32.xlu0 %v1258, 32
    %v1261 = vpop.permute.xlu0 %1260
    %v1262 = vsel %vm212, %v1261, 0
    %1264 = vmatprep.subr.mxu0 0.0
    %1265 = vmatpush1.msra.mxu0 %v1068
    %1266 = vmatprep.subr.mxu0 0.0
    %1267 = vmatpush1.msra.mxu0 %v1069
    %1268 = vmatprep.subr.mxu0 0.0
    %1269 = vmatpush1.msra.mxu0 %v1070
    %1270 = vmatprep.subr.mxu0 0.0
    %1271 = vmatpush1.msra.mxu0 %v1071
    %1272 = vmatprep.subr.mxu0 0.0
    %1273 = vmatpush1.msra.mxu0 0.0
    %1274 = vmatprep.subr.mxu0 0.0
    %1275 = vmatpush1.msra.mxu0 0.0
    %1276 = vmatprep.subr.mxu0 0.0
    %1277 = vmatpush1.msra.mxu0 0.0
    %1278 = vmatprep.subr.mxu0 0.0
    %1279 = vmatpush1.msra.mxu0 0.0
    %1280 = vmatprep.subr.mxu0 0.0
    %1281 = vmatpush1.msra.mxu0 0.0
    %1282 = vmatprep.subr.mxu0 0.0
    %1283 = vmatpush1.msra.mxu0 0.0
    %1284 = vmatprep.subr.mxu0 0.0
    %1285 = vmatpush1.msra.mxu0 0.0
    %1286 = vmatprep.subr.mxu0 0.0
    %1287 = vmatpush1.msra.mxu0 0.0
    %1288 = vmatprep.subr.mxu0 0.0
    %1289 = vmatpush1.msra.mxu0 0.0
    %1290 = vmatprep.subr.mxu0 0.0
    %1291 = vmatpush1.msra.mxu0 0.0
    %1292 = vmatprep.subr.mxu0 0.0
    %1293 = vmatpush1.msra.mxu0 0.0
    %1294 = vmatprep.subr.mxu0 0.0
    %1295 = vmatpush1.msra.mxu0 0.0
    %1296 = vmatprep.subr.mxu0 0.0
    %1297 = vmatpush1.msra.mxu0 0.0
    %1298 = vmatprep.subr.mxu0 0.0
    %1299 = vmatpush1.msra.mxu0 0.0
    %1300 = vmatprep.subr.mxu0 0.0
    %1301 = vmatpush1.msra.mxu0 0.0
    %1302 = vmatprep.subr.mxu0 0.0
    %1303 = vmatpush1.msra.mxu0 0.0
    %1304 = vmatprep.subr.mxu0 0.0
    %1305 = vmatpush1.msra.mxu0 0.0
    %1306 = vmatprep.subr.mxu0 0.0
    %1307 = vmatpush1.msra.mxu0 0.0
    %1308 = vmatprep.subr.mxu0 0.0
    %1309 = vmatpush1.msra.mxu0 0.0
    %1310 = vmatprep.subr.mxu0 0.0
    %1311 = vmatpush1.msra.mxu0 0.0
    %1312 = vmatprep.subr.mxu0 0.0
    %1313 = vmatpush1.msra.mxu0 0.0
    %1314 = vmatprep.subr.mxu0 0.0
    %1315 = vmatpush1.msra.mxu0 0.0
    %1316 = vmatprep.subr.mxu0 0.0
    %1317 = vmatpush1.msra.mxu0 0.0
    %1318 = vmatprep.subr.mxu0 0.0
    %1319 = vmatpush1.msra.mxu0 0.0
    %1320 = vmatprep.subr.mxu0 0.0
    %1321 = vmatpush1.msra.mxu0 0.0
    %1322 = vmatprep.subr.mxu0 0.0
    %1323 = vmatpush1.msra.mxu0 0.0
    %1324 = vmatprep.subr.mxu0 0.0
    %1325 = vmatpush1.msra.mxu0 0.0
    %1326 = vmatprep.subr.mxu0 0.0
    %1327 = vmatpush1.msra.mxu0 0.0
    %1328 = vmatprep.mubr.f32.mxu0 0.0
    %1329 = vmatmul.mubr.f32.gmra.mrb[0].mxu0 %v1262
    %v1330 = vpop.f32.mrb[0].mxu0
    %v1331 = vadd.f32 0.0, %v1330
    %v1332 = vpop.f32.mrb[0].mxu0
    %1333 = vdwg.mxu0
    %v1335 = vrot.slane %v1331, 6
    %v1337 = vadd.f32 %v1156, %v1335
    %v1338 = vxor.u32 %v1337, 2147483648
    %v1339 = vmul.f32 %v1338, 1.442695
    %v1340 = vpow.pop %v1339
    %v1341 = vadd.f32 %v1340, 1.0
    %v1342 = vrcp.pop %v1341
    %v1343 = vmul.f32 1.0, %v1342
    %v1344 = vtanh.pop %v1337
    %v1346 = vrot.slane %v1252, 6
    %v1348 = vmul.f32 %v1343, %v1346
    %1350 = vrot.lane.b32.xlu0 %v1344, 64
    %v1351 = vpop.permute.xlu0 %1350
    %v1353 = vmul.f32 %v1343, %v1351
    %1355 = vrot.lane.b32.xlu0 %v1353, 32
    %v1356 = vpop.permute.xlu0 %1355
    %v1358 = vadd.f32 %v1348, %v1356
    %v1359 = vtanh.pop %v1358
    %1361 = vrot.lane.b32.xlu0 %v1359, 64
    %v1362 = vpop.permute.xlu0 %1361
    %v1364 = vmul.f32 %v1343, %v1362
    %v1366 = vrot.slane %v1364, 2
    %1367 = vrot.lane.b32.xlu0 %v1366, 32
    %v1368 = vpop.permute.xlu0 %1367
    %v1369 = vsel %vm212, %v1368, 0
    %1371 = vmatprep.subr.mxu0 0.0
    %1372 = vmatpush1.msra.mxu0 %v1068
    %1373 = vmatprep.subr.mxu0 0.0
    %1374 = vmatpush1.msra.mxu0 %v1069
    %1375 = vmatprep.subr.mxu0 0.0
    %1376 = vmatpush1.msra.mxu0 %v1070
    %1377 = vmatprep.subr.mxu0 0.0
    %1378 = vmatpush1.msra.mxu0 %v1071
    %1379 = vmatprep.subr.mxu0 0.0
    %1380 = vmatpush1.msra.mxu0 0.0
    %1381 = vmatprep.subr.mxu0 0.0
    %1382 = vmatpush1.msra.mxu0 0.0
    %1383 = vmatprep.subr.mxu0 0.0
    %1384 = vmatpush1.msra.mxu0 0.0
    %1385 = vmatprep.subr.mxu0 0.0
    %1386 = vmatpush1.msra.mxu0 0.0
    %1387 = vmatprep.subr.mxu0 0.0
    %1388 = vmatpush1.msra.mxu0 0.0
    %1389 = vmatprep.subr.mxu0 0.0
    %1390 = vmatpush1.msra.mxu0 0.0
    %1391 = vmatprep.subr.mxu0 0.0
    %1392 = vmatpush1.msra.mxu0 0.0
    %1393 = vmatprep.subr.mxu0 0.0
    %1394 = vmatpush1.msra.mxu0 0.0
    %1395 = vmatprep.subr.mxu0 0.0
    %1396 = vmatpush1.msra.mxu0 0.0
    %1397 = vmatprep.subr.mxu0 0.0
    %1398 = vmatpush1.msra.mxu0 0.0
    %1399 = vmatprep.subr.mxu0 0.0
    %1400 = vmatpush1.msra.mxu0 0.0
    %1401 = vmatprep.subr.mxu0 0.0
    %1402 = vmatpush1.msra.mxu0 0.0
    %1403 = vmatprep.subr.mxu0 0.0
    %1404 = vmatpush1.msra.mxu0 0.0
    %1405 = vmatprep.subr.mxu0 0.0
    %1406 = vmatpush1.msra.mxu0 0.0
    %1407 = vmatprep.subr.mxu0 0.0
    %1408 = vmatpush1.msra.mxu0 0.0
    %1409 = vmatprep.subr.mxu0 0.0
    %1410 = vmatpush1.msra.mxu0 0.0
    %1411 = vmatprep.subr.mxu0 0.0
    %1412 = vmatpush1.msra.mxu0 0.0
    %1413 = vmatprep.subr.mxu0 0.0
    %1414 = vmatpush1.msra.mxu0 0.0
    %1415 = vmatprep.subr.mxu0 0.0
    %1416 = vmatpush1.msra.mxu0 0.0
    %1417 = vmatprep.subr.mxu0 0.0
    %1418 = vmatpush1.msra.mxu0 0.0
    %1419 = vmatprep.subr.mxu0 0.0
    %1420 = vmatpush1.msra.mxu0 0.0
    %1421 = vmatprep.subr.mxu0 0.0
    %1422 = vmatpush1.msra.mxu0 0.0
    %1423 = vmatprep.subr.mxu0 0.0
    %1424 = vmatpush1.msra.mxu0 0.0
    %1425 = vmatprep.subr.mxu0 0.0
    %1426 = vmatpush1.msra.mxu0 0.0
    %1427 = vmatprep.subr.mxu0 0.0
    %1428 = vmatpush1.msra.mxu0 0.0
    %1429 = vmatprep.subr.mxu0 0.0
    %1430 = vmatpush1.msra.mxu0 0.0
    %1431 = vmatprep.subr.mxu0 0.0
    %1432 = vmatpush1.msra.mxu0 0.0
    %1433 = vmatprep.subr.mxu0 0.0
    %1434 = vmatpush1.msra.mxu0 0.0
    %1435 = vmatprep.mubr.f32.mxu0 0.0
    %1436 = vmatmul.mubr.f32.gmra.mrb[0].mxu0 %v1369
    %v1437 = vpop.f32.mrb[0].mxu0
    %v1438 = vadd.f32 0.0, %v1437
    %v1439 = vpop.f32.mrb[0].mxu0
    %1440 = vdwg.mxu0
    %v1442 = vrot.slane %v1438, 4
    %v1444 = vadd.f32 %v1156, %v1442
    %v1445 = vxor.u32 %v1444, 2147483648
    %v1446 = vmul.f32 %v1445, 1.442695
    %v1447 = vpow.pop %v1446
    %v1448 = vadd.f32 %v1447, 1.0
    %v1449 = vrcp.pop %v1448
    %v1450 = vmul.f32 1.0, %v1449
    %v1451 = vtanh.pop %v1444
    %v1453 = vrot.slane %v1358, 6
    %v1455 = vmul.f32 %v1450, %v1453
    %1457 = vrot.lane.b32.xlu0 %v1451, 64
    %v1458 = vpop.permute.xlu0 %1457
    %v1460 = vmul.f32 %v1450, %v1458
    %1462 = vrot.lane.b32.xlu0 %v1460, 32
    %v1463 = vpop.permute.xlu0 %1462
    %v1465 = vadd.f32 %v1455, %v1463
    %v1466 = vtanh.pop %v1465
    %1468 = vrot.lane.b32.xlu0 %v1466, 64
    %v1469 = vpop.permute.xlu0 %1468
    %v1471 = vmul.f32 %v1450, %v1469
    %v1473 = vrot.slane %v1471, 4
    %1474 = vrot.lane.b32.xlu0 %v1473, 32
    %v1475 = vpop.permute.xlu0 %1474
    %v1476 = vsel %vm212, %v1475, 0
    %1478 = vmatprep.subr.mxu0 0.0
    %1479 = vmatpush1.msra.mxu0 %v1068
    %1480 = vmatprep.subr.mxu0 0.0
    %1481 = vmatpush1.msra.mxu0 %v1069
    %1482 = vmatprep.subr.mxu0 0.0
    %1483 = vmatpush1.msra.mxu0 %v1070
    %1484 = vmatprep.subr.mxu0 0.0
    %1485 = vmatpush1.msra.mxu0 %v1071
    %1486 = vmatprep.subr.mxu0 0.0
    %1487 = vmatpush1.msra.mxu0 0.0
    %1488 = vmatprep.subr.mxu0 0.0
    %1489 = vmatpush1.msra.mxu0 0.0
    %1490 = vmatprep.subr.mxu0 0.0
    %1491 = vmatpush1.msra.mxu0 0.0
    %1492 = vmatprep.subr.mxu0 0.0
    %1493 = vmatpush1.msra.mxu0 0.0
    %1494 = vmatprep.subr.mxu0 0.0
    %1495 = vmatpush1.msra.mxu0 0.0
    %1496 = vmatprep.subr.mxu0 0.0
    %1497 = vmatpush1.msra.mxu0 0.0
    %1498 = vmatprep.subr.mxu0 0.0
    %1499 = vmatpush1.msra.mxu0 0.0
    %1500 = vmatprep.subr.mxu0 0.0
    %1501 = vmatpush1.msra.mxu0 0.0
    %1502 = vmatprep.subr.mxu0 0.0
    %1503 = vmatpush1.msra.mxu0 0.0
    %1504 = vmatprep.subr.mxu0 0.0
    %1505 = vmatpush1.msra.mxu0 0.0
    %1506 = vmatprep.subr.mxu0 0.0
    %1507 = vmatpush1.msra.mxu0 0.0
    %1508 = vmatprep.subr.mxu0 0.0
    %1509 = vmatpush1.msra.mxu0 0.0
    %1510 = vmatprep.subr.mxu0 0.0
    %1511 = vmatpush1.msra.mxu0 0.0
    %1512 = vmatprep.subr.mxu0 0.0
    %1513 = vmatpush1.msra.mxu0 0.0
    %1514 = vmatprep.subr.mxu0 0.0
    %1515 = vmatpush1.msra.mxu0 0.0
    %1516 = vmatprep.subr.mxu0 0.0
    %1517 = vmatpush1.msra.mxu0 0.0
    %1518 = vmatprep.subr.mxu0 0.0
    %1519 = vmatpush1.msra.mxu0 0.0
    %1520 = vmatprep.subr.mxu0 0.0
    %1521 = vmatpush1.msra.mxu0 0.0
    %1522 = vmatprep.subr.mxu0 0.0
    %1523 = vmatpush1.msra.mxu0 0.0
    %1524 = vmatprep.subr.mxu0 0.0
    %1525 = vmatpush1.msra.mxu0 0.0
    %1526 = vmatprep.subr.mxu0 0.0
    %1527 = vmatpush1.msra.mxu0 0.0
    %1528 = vmatprep.subr.mxu0 0.0
    %1529 = vmatpush1.msra.mxu0 0.0
    %1530 = vmatprep.subr.mxu0 0.0
    %1531 = vmatpush1.msra.mxu0 0.0
    %1532 = vmatprep.subr.mxu0 0.0
    %1533 = vmatpush1.msra.mxu0 0.0
    %1534 = vmatprep.subr.mxu0 0.0
    %1535 = vmatpush1.msra.mxu0 0.0
    %1536 = vmatprep.subr.mxu0 0.0
    %1537 = vmatpush1.msra.mxu0 0.0
    %1538 = vmatprep.subr.mxu0 0.0
    %1539 = vmatpush1.msra.mxu0 0.0
    %1540 = vmatprep.subr.mxu0 0.0
    %1541 = vmatpush1.msra.mxu0 0.0
    %1542 = vmatprep.mubr.f32.mxu0 0.0
    %1543 = vmatmul.mubr.f32.gmra.mrb[0].mxu0 %v1476
    %v1544 = vpop.f32.mrb[0].mxu0
    %v1545 = vadd.f32 0.0, %v1544
    %v1546 = vpop.f32.mrb[0].mxu0
    %1547 = vdwg.mxu0
    %v1549 = vrot.slane %v1545, 2
    %v1551 = vadd.f32 %v1156, %v1549
    %v1552 = vxor.u32 %v1551, 2147483648
    %v1553 = vmul.f32 %v1552, 1.442695
    %v1554 = vpow.pop %v1553
    %v1555 = vadd.f32 %v1554, 1.0
    %v1556 = vrcp.pop %v1555
    %v1557 = vmul.f32 1.0, %v1556
    %v1558 = vtanh.pop %v1551
    %v1560 = vrot.slane %v1465, 6
    %v1562 = vmul.f32 %v1557, %v1560
    %1564 = vrot.lane.b32.xlu0 %v1558, 64
    %v1565 = vpop.permute.xlu0 %1564
    %v1567 = vmul.f32 %v1557, %v1565
    %1569 = vrot.lane.b32.xlu0 %v1567, 32
    %v1570 = vpop.permute.xlu0 %1569
    %v1572 = vadd.f32 %v1562, %v1570
    %v1573 = vtanh.pop %v1572
    %1575 = vrot.lane.b32.xlu0 %v1573, 64
    %v1576 = vpop.permute.xlu0 %1575
    %v1578 = vmul.f32 %v1557, %v1576
    %v1580 = vrot.slane %v1578, 6
    %1581 = vrot.lane.b32.xlu0 %v1580, 32
    %v1582 = vpop.permute.xlu0 %1581
    %v1583 = vsel %vm212, %v1582, 0
    %1585 = vmatprep.subr.mxu0 0.0
    %1586 = vmatpush1.msra.mxu0 %v1068
    %1587 = vmatprep.subr.mxu0 0.0
    %1588 = vmatpush1.msra.mxu0 %v1069
    %1589 = vmatprep.subr.mxu0 0.0
    %1590 = vmatpush1.msra.mxu0 %v1070
    %1591 = vmatprep.subr.mxu0 0.0
    %1592 = vmatpush1.msra.mxu0 %v1071
    %1593 = vmatprep.subr.mxu0 0.0
    %1594 = vmatpush1.msra.mxu0 0.0
    %1595 = vmatprep.subr.mxu0 0.0
    %1596 = vmatpush1.msra.mxu0 0.0
    %1597 = vmatprep.subr.mxu0 0.0
    %1598 = vmatpush1.msra.mxu0 0.0
    %1599 = vmatprep.subr.mxu0 0.0
    %1600 = vmatpush1.msra.mxu0 0.0
    %1601 = vmatprep.subr.mxu0 0.0
    %1602 = vmatpush1.msra.mxu0 0.0
    %1603 = vmatprep.subr.mxu0 0.0
    %1604 = vmatpush1.msra.mxu0 0.0
    %1605 = vmatprep.subr.mxu0 0.0
    %1606 = vmatpush1.msra.mxu0 0.0
    %1607 = vmatprep.subr.mxu0 0.0
    %1608 = vmatpush1.msra.mxu0 0.0
    %1609 = vmatprep.subr.mxu0 0.0
    %1610 = vmatpush1.msra.mxu0 0.0
    %1611 = vmatprep.subr.mxu0 0.0
    %1612 = vmatpush1.msra.mxu0 0.0
    %1613 = vmatprep.subr.mxu0 0.0
    %1614 = vmatpush1.msra.mxu0 0.0
    %1615 = vmatprep.subr.mxu0 0.0
    %1616 = vmatpush1.msra.mxu0 0.0
    %1617 = vmatprep.subr.mxu0 0.0
    %1618 = vmatpush1.msra.mxu0 0.0
    %1619 = vmatprep.subr.mxu0 0.0
    %1620 = vmatpush1.msra.mxu0 0.0
    %1621 = vmatprep.subr.mxu0 0.0
    %1622 = vmatpush1.msra.mxu0 0.0
    %1623 = vmatprep.subr.mxu0 0.0
    %1624 = vmatpush1.msra.mxu0 0.0
    %1625 = vmatprep.subr.mxu0 0.0
    %1626 = vmatpush1.msra.mxu0 0.0
    %1627 = vmatprep.subr.mxu0 0.0
    %1628 = vmatpush1.msra.mxu0 0.0
    %1629 = vmatprep.subr.mxu0 0.0
    %1630 = vmatpush1.msra.mxu0 0.0
    %1631 = vmatprep.subr.mxu0 0.0
    %1632 = vmatpush1.msra.mxu0 0.0
    %1633 = vmatprep.subr.mxu0 0.0
    %1634 = vmatpush1.msra.mxu0 0.0
    %1635 = vmatprep.subr.mxu0 0.0
    %1636 = vmatpush1.msra.mxu0 0.0
    %1637 = vmatprep.subr.mxu0 0.0
    %1638 = vmatpush1.msra.mxu0 0.0
    %1639 = vmatprep.subr.mxu0 0.0
    %1640 = vmatpush1.msra.mxu0 0.0
    %1641 = vmatprep.subr.mxu0 0.0
    %1642 = vmatpush1.msra.mxu0 0.0
    %1643 = vmatprep.subr.mxu0 0.0
    %1644 = vmatpush1.msra.mxu0 0.0
    %1645 = vmatprep.subr.mxu0 0.0
    %1646 = vmatpush1.msra.mxu0 0.0
    %1647 = vmatprep.subr.mxu0 0.0
    %1648 = vmatpush1.msra.mxu0 0.0
    %1649 = vmatprep.mubr.f32.mxu0 0.0
    %1650 = vmatmul.mubr.f32.gmra.mrb[0].mxu0 %v1583
    %v1651 = vpop.f32.mrb[0].mxu0
    %v1652 = vadd.f32 0.0, %v1651
    %v1653 = vpop.f32.mrb[0].mxu0
    %1654 = vdwg.mxu0
    %v1655 = vadd.f32 %v1161, %v1652
    %v1656 = vxor.u32 %v1655, 2147483648
    %v1657 = vmul.f32 %v1656, 1.442695
    %v1658 = vpow.pop %v1657
    %v1659 = vadd.f32 %v1658, 1.0
    %v1660 = vrcp.pop %v1659
    %v1661 = vmul.f32 1.0, %v1660
    %v1662 = vtanh.pop %v1655
    %v1664 = vrot.slane %v1572, 6
    %v1666 = vmul.f32 %v1661, %v1664
    %1668 = vrot.lane.b32.xlu0 %v1662, 64
    %v1669 = vpop.permute.xlu0 %1668
    %v1671 = vmul.f32 %v1661, %v1669
    %1673 = vrot.lane.b32.xlu0 %v1671, 32
    %v1674 = vpop.permute.xlu0 %1673
    %v1676 = vadd.f32 %v1666, %v1674
    %v1677 = vtanh.pop %v1676
    %1679 = vrot.lane.b32.xlu0 %v1677, 64
    %v1680 = vpop.permute.xlu0 %1679
    %v1682 = vmul.f32 %v1661, %v1680
    %1684 = vrot.lane.b32.xlu0 %v1682, 32
    %v1685 = vpop.permute.xlu0 %1684
    %v1686 = vsel %vm212, %v1685, 0
    %1688 = vmatprep.subr.mxu0 0.0
    %1689 = vmatpush1.msra.mxu0 %v1068
    %1690 = vmatprep.subr.mxu0 0.0
    %1691 = vmatpush1.msra.mxu0 %v1069
    %1692 = vmatprep.subr.mxu0 0.0
    %1693 = vmatpush1.msra.mxu0 %v1070
    %1694 = vmatprep.subr.mxu0 0.0
    %1695 = vmatpush1.msra.mxu0 %v1071
    %1696 = vmatprep.subr.mxu0 0.0
    %1697 = vmatpush1.msra.mxu0 0.0
    %1698 = vmatprep.subr.mxu0 0.0
    %1699 = vmatpush1.msra.mxu0 0.0
    %1700 = vmatprep.subr.mxu0 0.0
    %1701 = vmatpush1.msra.mxu0 0.0
    %1702 = vmatprep.subr.mxu0 0.0
    %1703 = vmatpush1.msra.mxu0 0.0
    %1704 = vmatprep.subr.mxu0 0.0
    %1705 = vmatpush1.msra.mxu0 0.0
    %1706 = vmatprep.subr.mxu0 0.0
    %1707 = vmatpush1.msra.mxu0 0.0
    %1708 = vmatprep.subr.mxu0 0.0
    %1709 = vmatpush1.msra.mxu0 0.0
    %1710 = vmatprep.subr.mxu0 0.0
    %1711 = vmatpush1.msra.mxu0 0.0
    %1712 = vmatprep.subr.mxu0 0.0
    %1713 = vmatpush1.msra.mxu0 0.0
    %1714 = vmatprep.subr.mxu0 0.0
    %1715 = vmatpush1.msra.mxu0 0.0
    %1716 = vmatprep.subr.mxu0 0.0
    %1717 = vmatpush1.msra.mxu0 0.0
    %1718 = vmatprep.subr.mxu0 0.0
    %1719 = vmatpush1.msra.mxu0 0.0
    %1720 = vmatprep.subr.mxu0 0.0
    %1721 = vmatpush1.msra.mxu0 0.0
    %1722 = vmatprep.subr.mxu0 0.0
    %1723 = vmatpush1.msra.mxu0 0.0
    %1724 = vmatprep.subr.mxu0 0.0
    %1725 = vmatpush1.msra.mxu0 0.0
    %1726 = vmatprep.subr.mxu0 0.0
    %1727 = vmatpush1.msra.mxu0 0.0
    %1728 = vmatprep.subr.mxu0 0.0
    %1729 = vmatpush1.msra.mxu0 0.0
    %1730 = vmatprep.subr.mxu0 0.0
    %1731 = vmatpush1.msra.mxu0 0.0
    %1732 = vmatprep.subr.mxu0 0.0
    %1733 = vmatpush1.msra.mxu0 0.0
    %1734 = vmatprep.subr.mxu0 0.0
    %1735 = vmatpush1.msra.mxu0 0.0
    %1736 = vmatprep.subr.mxu0 0.0
    %1737 = vmatpush1.msra.mxu0 0.0
    %1738 = vmatprep.subr.mxu0 0.0
    %1739 = vmatpush1.msra.mxu0 0.0
    %1740 = vmatprep.subr.mxu0 0.0
    %1741 = vmatpush1.msra.mxu0 0.0
    %1742 = vmatprep.subr.mxu0 0.0
    %1743 = vmatpush1.msra.mxu0 0.0
    %1744 = vmatprep.subr.mxu0 0.0
    %1745 = vmatpush1.msra.mxu0 0.0
    %1746 = vmatprep.subr.mxu0 0.0
    %1747 = vmatpush1.msra.mxu0 0.0
    %1748 = vmatprep.subr.mxu0 0.0
    %1749 = vmatpush1.msra.mxu0 0.0
    %1750 = vmatprep.subr.mxu0 0.0
    %1751 = vmatpush1.msra.mxu0 0.0
    %1752 = vmatprep.mubr.f32.mxu0 0.0
    %1753 = vmatmul.mubr.f32.gmra.mrb[0].mxu0 %v1686
    %v1754 = vpop.f32.mrb[0].mxu0
    %v1755 = vadd.f32 0.0, %v1754
    %v1756 = vpop.f32.mrb[0].mxu0
    %1757 = vdwg.mxu0
    %v1759 = vrot.slane %v1755, 6
    %v1761 = vadd.f32 %v1161, %v1759
    %v1762 = vxor.u32 %v1761, 2147483648
    %v1763 = vmul.f32 %v1762, 1.442695
    %v1764 = vpow.pop %v1763
    %v1765 = vadd.f32 %v1764, 1.0
    %v1766 = vrcp.pop %v1765
    %v1767 = vmul.f32 1.0, %v1766
    %v1768 = vtanh.pop %v1761
    %v1770 = vrot.slane %v1676, 6
    %v1772 = vmul.f32 %v1767, %v1770
    %1774 = vrot.lane.b32.xlu0 %v1768, 64
    %v1775 = vpop.permute.xlu0 %1774
    %v1777 = vmul.f32 %v1767, %v1775
    %1779 = vrot.lane.b32.xlu0 %v1777, 32
    %v1780 = vpop.permute.xlu0 %1779
    %v1782 = vadd.f32 %v1772, %v1780
    %v1783 = vtanh.pop %v1782
    %1785 = vrot.lane.b32.xlu0 %v1783, 64
    %v1786 = vpop.permute.xlu0 %1785
    %v1788 = vmul.f32 %v1767, %v1786
    %v1790 = vrot.slane %v1788, 2
    %1791 = vrot.lane.b32.xlu0 %v1790, 32
    %v1792 = vpop.permute.xlu0 %1791
    %v1793 = vsel %vm212, %v1792, 0
    %1795 = vmatprep.subr.mxu0 0.0
    %1796 = vmatpush1.msra.mxu0 %v1068
    %1797 = vmatprep.subr.mxu0 0.0
    %1798 = vmatpush1.msra.mxu0 %v1069
    %1799 = vmatprep.subr.mxu0 0.0
    %1800 = vmatpush1.msra.mxu0 %v1070
    %1801 = vmatprep.subr.mxu0 0.0
    %1802 = vmatpush1.msra.mxu0 %v1071
    %1803 = vmatprep.subr.mxu0 0.0
    %1804 = vmatpush1.msra.mxu0 0.0
    %1805 = vmatprep.subr.mxu0 0.0
    %1806 = vmatpush1.msra.mxu0 0.0
    %1807 = vmatprep.subr.mxu0 0.0
    %1808 = vmatpush1.msra.mxu0 0.0
    %1809 = vmatprep.subr.mxu0 0.0
    %1810 = vmatpush1.msra.mxu0 0.0
    %1811 = vmatprep.subr.mxu0 0.0
    %1812 = vmatpush1.msra.mxu0 0.0
    %1813 = vmatprep.subr.mxu0 0.0
    %1814 = vmatpush1.msra.mxu0 0.0
    %1815 = vmatprep.subr.mxu0 0.0
    %1816 = vmatpush1.msra.mxu0 0.0
    %1817 = vmatprep.subr.mxu0 0.0
    %1818 = vmatpush1.msra.mxu0 0.0
    %1819 = vmatprep.subr.mxu0 0.0
    %1820 = vmatpush1.msra.mxu0 0.0
    %1821 = vmatprep.subr.mxu0 0.0
    %1822 = vmatpush1.msra.mxu0 0.0
    %1823 = vmatprep.subr.mxu0 0.0
    %1824 = vmatpush1.msra.mxu0 0.0
    %1825 = vmatprep.subr.mxu0 0.0
    %1826 = vmatpush1.msra.mxu0 0.0
    %1827 = vmatprep.subr.mxu0 0.0
    %1828 = vmatpush1.msra.mxu0 0.0
    %1829 = vmatprep.subr.mxu0 0.0
    %1830 = vmatpush1.msra.mxu0 0.0
    %1831 = vmatprep.subr.mxu0 0.0
    %1832 = vmatpush1.msra.mxu0 0.0
    %1833 = vmatprep.subr.mxu0 0.0
    %1834 = vmatpush1.msra.mxu0 0.0
    %1835 = vmatprep.subr.mxu0 0.0
    %1836 = vmatpush1.msra.mxu0 0.0
    %1837 = vmatprep.subr.mxu0 0.0
    %1838 = vmatpush1.msra.mxu0 0.0
    %1839 = vmatprep.subr.mxu0 0.0
    %1840 = vmatpush1.msra.mxu0 0.0
    %1841 = vmatprep.subr.mxu0 0.0
    %1842 = vmatpush1.msra.mxu0 0.0
    %1843 = vmatprep.subr.mxu0 0.0
    %1844 = vmatpush1.msra.mxu0 0.0
    %1845 = vmatprep.subr.mxu0 0.0
    %1846 = vmatpush1.msra.mxu0 0.0
    %1847 = vmatprep.subr.mxu0 0.0
    %1848 = vmatpush1.msra.mxu0 0.0
    %1849 = vmatprep.subr.mxu0 0.0
    %1850 = vmatpush1.msra.mxu0 0.0
    %1851 = vmatprep.subr.mxu0 0.0
    %1852 = vmatpush1.msra.mxu0 0.0
    %1853 = vmatprep.subr.mxu0 0.0
    %1854 = vmatpush1.msra.mxu0 0.0
    %1855 = vmatprep.subr.mxu0 0.0
    %1856 = vmatpush1.msra.mxu0 0.0
    %1857 = vmatprep.subr.mxu0 0.0
    %1858 = vmatpush1.msra.mxu0 0.0
    %1859 = vmatprep.mubr.f32.mxu0 0.0
    %1860 = vmatmul.mubr.f32.gmra.mrb[0].mxu0 %v1793
    %v1861 = vpop.f32.mrb[0].mxu0
    %v1862 = vadd.f32 0.0, %v1861
    %v1863 = vpop.f32.mrb[0].mxu0
    %1864 = vdwg.mxu0
    %v1866 = vrot.slane %v1862, 4
    %v1868 = vadd.f32 %v1161, %v1866
    %v1869 = vxor.u32 %v1868, 2147483648
    %v1870 = vmul.f32 %v1869, 1.442695
    %v1871 = vpow.pop %v1870
    %v1872 = vadd.f32 %v1871, 1.0
    %v1873 = vrcp.pop %v1872
    %v1874 = vmul.f32 1.0, %v1873
    %v1875 = vtanh.pop %v1868
    %v1877 = vrot.slane %v1782, 6
    %v1879 = vmul.f32 %v1874, %v1877
    %1881 = vrot.lane.b32.xlu0 %v1875, 64
    %v1882 = vpop.permute.xlu0 %1881
    %v1884 = vmul.f32 %v1874, %v1882
    %1886 = vrot.lane.b32.xlu0 %v1884, 32
    %v1887 = vpop.permute.xlu0 %1886
    %v1889 = vadd.f32 %v1879, %v1887
    %v1890 = vtanh.pop %v1889
    %1892 = vrot.lane.b32.xlu0 %v1890, 64
    %v1893 = vpop.permute.xlu0 %1892
    %v1895 = vmul.f32 %v1874, %v1893
    %v1897 = vrot.slane %v1895, 4
    %1898 = vrot.lane.b32.xlu0 %v1897, 32
    %v1899 = vpop.permute.xlu0 %1898
    %v1900 = vsel %vm212, %v1899, 0
    %1902 = vmatprep.subr.mxu0 0.0
    %1903 = vmatpush1.msra.mxu0 %v1068
    %1904 = vmatprep.subr.mxu0 0.0
    %1905 = vmatpush1.msra.mxu0 %v1069
    %1906 = vmatprep.subr.mxu0 0.0
    %1907 = vmatpush1.msra.mxu0 %v1070
    %1908 = vmatprep.subr.mxu0 0.0
    %1909 = vmatpush1.msra.mxu0 %v1071
    %1910 = vmatprep.subr.mxu0 0.0
    %1911 = vmatpush1.msra.mxu0 0.0
    %1912 = vmatprep.subr.mxu0 0.0
    %1913 = vmatpush1.msra.mxu0 0.0
    %1914 = vmatprep.subr.mxu0 0.0
    %1915 = vmatpush1.msra.mxu0 0.0
    %1916 = vmatprep.subr.mxu0 0.0
    %1917 = vmatpush1.msra.mxu0 0.0
    %1918 = vmatprep.subr.mxu0 0.0
    %1919 = vmatpush1.msra.mxu0 0.0
    %1920 = vmatprep.subr.mxu0 0.0
    %1921 = vmatpush1.msra.mxu0 0.0
    %1922 = vmatprep.subr.mxu0 0.0
    %1923 = vmatpush1.msra.mxu0 0.0
    %1924 = vmatprep.subr.mxu0 0.0
    %1925 = vmatpush1.msra.mxu0 0.0
    %1926 = vmatprep.subr.mxu0 0.0
    %1927 = vmatpush1.msra.mxu0 0.0
    %1928 = vmatprep.subr.mxu0 0.0
    %1929 = vmatpush1.msra.mxu0 0.0
    %1930 = vmatprep.subr.mxu0 0.0
    %1931 = vmatpush1.msra.mxu0 0.0
    %1932 = vmatprep.subr.mxu0 0.0
    %1933 = vmatpush1.msra.mxu0 0.0
    %1934 = vmatprep.subr.mxu0 0.0
    %1935 = vmatpush1.msra.mxu0 0.0
    %1936 = vmatprep.subr.mxu0 0.0
    %1937 = vmatpush1.msra.mxu0 0.0
    %1938 = vmatprep.subr.mxu0 0.0
    %1939 = vmatpush1.msra.mxu0 0.0
    %1940 = vmatprep.subr.mxu0 0.0
    %1941 = vmatpush1.msra.mxu0 0.0
    %1942 = vmatprep.subr.mxu0 0.0
    %1943 = vmatpush1.msra.mxu0 0.0
    %1944 = vmatprep.subr.mxu0 0.0
    %1945 = vmatpush1.msra.mxu0 0.0
    %1946 = vmatprep.subr.mxu0 0.0
    %1947 = vmatpush1.msra.mxu0 0.0
    %1948 = vmatprep.subr.mxu0 0.0
    %1949 = vmatpush1.msra.mxu0 0.0
    %1950 = vmatprep.subr.mxu0 0.0
    %1951 = vmatpush1.msra.mxu0 0.0
    %1952 = vmatprep.subr.mxu0 0.0
    %1953 = vmatpush1.msra.mxu0 0.0
    %1954 = vmatprep.subr.mxu0 0.0
    %1955 = vmatpush1.msra.mxu0 0.0
    %1956 = vmatprep.subr.mxu0 0.0
    %1957 = vmatpush1.msra.mxu0 0.0
    %1958 = vmatprep.subr.mxu0 0.0
    %1959 = vmatpush1.msra.mxu0 0.0
    %1960 = vmatprep.subr.mxu0 0.0
    %1961 = vmatpush1.msra.mxu0 0.0
    %1962 = vmatprep.subr.mxu0 0.0
    %1963 = vmatpush1.msra.mxu0 0.0
    %1964 = vmatprep.subr.mxu0 0.0
    %1965 = vmatpush1.msra.mxu0 0.0
    %1966 = vmatprep.mubr.f32.mxu0 0.0
    %1967 = vmatmul.mubr.f32.gmra.mrb[0].mxu0 %v1900
    %v1968 = vpop.f32.mrb[0].mxu0
    %v1969 = vadd.f32 0.0, %v1968
    %v1970 = vpop.f32.mrb[0].mxu0
    %1971 = vdwg.mxu0
    %v1973 = vrot.slane %v1969, 2
    %v1975 = vadd.f32 %v1161, %v1973
    %v1976 = vxor.u32 %v1975, 2147483648
    %v1977 = vmul.f32 %v1976, 1.442695
    %v1978 = vpow.pop %v1977
    %v1979 = vadd.f32 %v1978, 1.0
    %v1980 = vrcp.pop %v1979
    %v1981 = vmul.f32 1.0, %v1980
    %v1982 = vtanh.pop %v1975
    %v1984 = vrot.slane %v1889, 6
    %v1986 = vmul.f32 %v1981, %v1984
    %1988 = vrot.lane.b32.xlu0 %v1982, 64
    %v1989 = vpop.permute.xlu0 %1988
    %v1991 = vmul.f32 %v1981, %v1989
    %1993 = vrot.lane.b32.xlu0 %v1991, 32
    %v1994 = vpop.permute.xlu0 %1993
    %v1996 = vadd.f32 %v1986, %v1994
    %v1997 = vtanh.pop %v1996
    %1999 = vrot.lane.b32.xlu0 %v1997, 64
    %v2000 = vpop.permute.xlu0 %1999
    %v2002 = vmul.f32 %v1981, %v2000
    %2004 = vrot.lane.b32.xlu0 %v1366, 64
    %v2005 = vpop.permute.xlu0 %2004
    %2007 = vrot.lane.b32.xlu0 %v1473, 96
    %v2008 = vpop.permute.xlu0 %2007
    %2012 = vrot.lane.b32.xlu0 %v1790, 64
    %v2013 = vpop.permute.xlu0 %2012
    %2015 = vrot.lane.b32.xlu0 %v1897, 96
    %v2016 = vpop.permute.xlu0 %2015
    %v2019 = vrot.slane %v2002, 6
    %v2021 = vsel %vm212, %v1261, %v2005
    %vm2022 = vcmask 523264
    %v2023 = vsel %vm2022, %v2021, %v2008
    %vm2024 = vcmask 785408
    %v2025 = vsel %vm2024, %v2023, %v1580
    %v2026 = vsel %vm212, %v1685, %v2013
    %v2027 = vsel %vm2022, %v2026, %v2016
    %v2028 = vsel %vm2024, %v2027, %v2019
    %v2031 = vcombine.low %v2025, %v2028
    %v2033 = vunpack.c.l.s4 1983009808
    %v2034 = vunpack.c.0.s8 %v2033
    %v2035 = vlaneseq
    %v2036 = vshrl.u32 %v2035, 7
    %v2037 = vsub.s32 %v2034, %v2036
    %v2038 = vrot.slane %v2031, %v2037
    %2040 = vst [vmem:[#allocation12] sm:$0xf] %v2038
    %v2041 = vld [vmem:[#allocation11] sm:$0xff]
    %v2042 = vld [vmem:[#allocation11 + $0x8] sm:$0xff]
    %v2043 = vld [vmem:[#allocation11 + $0x10] sm:$0xff]
    %v2044 = vld [vmem:[#allocation11 + $0x18] sm:$0xff]
    %v2045 = vld [vmem:[%s8] sm:$0x1]
    %v2047 = vlaneseq
    %v2048 = vshrl.u32 %v2047, 7
    %v2049 = vsub.s32 0, %v2048
    %v2050 = vrot.slane %v2045, %v2049
    %2052 = vrot.lane.b32.xlu0 %v2019, 32
    %v2053 = vpop.permute.xlu0 %2052
    %v2054 = vsel %vm212, %v2053, 0
    %2056 = vmatprep.subr.mxu0 0.0
    %2057 = vmatpush1.msra.mxu0 %v2041
    %2058 = vmatprep.subr.mxu0 0.0
    %2059 = vmatpush1.msra.mxu0 %v2042
    %2060 = vmatprep.subr.mxu0 0.0
    %2061 = vmatpush1.msra.mxu0 %v2043
    %2062 = vmatprep.subr.mxu0 0.0
    %2063 = vmatpush1.msra.mxu0 %v2044
    %2064 = vmatprep.subr.mxu0 0.0
    %2065 = vmatpush1.msra.mxu0 0.0
    %2066 = vmatprep.subr.mxu0 0.0
    %2067 = vmatpush1.msra.mxu0 0.0
    %2068 = vmatprep.subr.mxu0 0.0
    %2069 = vmatpush1.msra.mxu0 0.0
    %2070 = vmatprep.subr.mxu0 0.0
    %2071 = vmatpush1.msra.mxu0 0.0
    %2072 = vmatprep.subr.mxu0 0.0
    %2073 = vmatpush1.msra.mxu0 0.0
    %2074 = vmatprep.subr.mxu0 0.0
    %2075 = vmatpush1.msra.mxu0 0.0
    %2076 = vmatprep.subr.mxu0 0.0
    %2077 = vmatpush1.msra.mxu0 0.0
    %2078 = vmatprep.subr.mxu0 0.0
    %2079 = vmatpush1.msra.mxu0 0.0
    %2080 = vmatprep.subr.mxu0 0.0
    %2081 = vmatpush1.msra.mxu0 0.0
    %2082 = vmatprep.subr.mxu0 0.0
    %2083 = vmatpush1.msra.mxu0 0.0
    %2084 = vmatprep.subr.mxu0 0.0
    %2085 = vmatpush1.msra.mxu0 0.0
    %2086 = vmatprep.subr.mxu0 0.0
    %2087 = vmatpush1.msra.mxu0 0.0
    %2088 = vmatprep.subr.mxu0 0.0
    %2089 = vmatpush1.msra.mxu0 0.0
    %2090 = vmatprep.subr.mxu0 0.0
    %2091 = vmatpush1.msra.mxu0 0.0
    %2092 = vmatprep.subr.mxu0 0.0
    %2093 = vmatpush1.msra.mxu0 0.0
    %2094 = vmatprep.subr.mxu0 0.0
    %2095 = vmatpush1.msra.mxu0 0.0
    %2096 = vmatprep.subr.mxu0 0.0
    %2097 = vmatpush1.msra.mxu0 0.0
    %2098 = vmatprep.subr.mxu0 0.0
    %2099 = vmatpush1.msra.mxu0 0.0
    %2100 = vmatprep.subr.mxu0 0.0
    %2101 = vmatpush1.msra.mxu0 0.0
    %2102 = vmatprep.subr.mxu0 0.0
    %2103 = vmatpush1.msra.mxu0 0.0
    %2104 = vmatprep.subr.mxu0 0.0
    %2105 = vmatpush1.msra.mxu0 0.0
    %2106 = vmatprep.subr.mxu0 0.0
    %2107 = vmatpush1.msra.mxu0 0.0
    %2108 = vmatprep.subr.mxu0 0.0
    %2109 = vmatpush1.msra.mxu0 0.0
    %2110 = vmatprep.subr.mxu0 0.0
    %2111 = vmatpush1.msra.mxu0 0.0
    %2112 = vmatprep.subr.mxu0 0.0
    %2113 = vmatpush1.msra.mxu0 0.0
    %2114 = vmatprep.subr.mxu0 0.0
    %2115 = vmatpush1.msra.mxu0 0.0
    %2116 = vmatprep.subr.mxu0 0.0
    %2117 = vmatpush1.msra.mxu0 0.0
    %2118 = vmatprep.subr.mxu0 0.0
    %2119 = vmatpush1.msra.mxu0 0.0
    %2120 = vmatprep.mubr.f32.mxu0 0.0
    %2121 = vmatmul.mubr.f32.gmra.mrb[0].mxu0 %v2054
    %v2122 = vpop.f32.mrb[0].mxu0
    %v2123 = vadd.f32 %v2050, %v2122
    %v2124 = vpop.f32.mrb[0].mxu0
    %2125 = vdwg.mxu0
    %v2126 = vmax.f32 %v2123, 0.0
    %v2127 = vld [vmem:[%s9] sm:$0xff]
    %v2128 = vld [vmem:[%s9 + $0x8] sm:$0xff]
    %v2129 = vld [vmem:[%s9 + $0x10] sm:$0xff]
    %v2130 = vld [vmem:[%s9 + $0x18] sm:$0xff]
    %v2131 = vld [vmem:[%s10] sm:$0x1]
    %v2133 = vlaneseq
    %v2134 = vshrl.u32 %v2133, 7
    %v2135 = vsub.s32 0, %v2134
    %v2136 = vrot.slane %v2131, %v2135
    %v2139 = vsel %vm212, %v2126, 0
    %2141 = vmatprep.subr.mxu0 0.0
    %2142 = vmatpush1.msra.mxu0 %v2127
    %2143 = vmatprep.subr.mxu0 0.0
    %2144 = vmatpush1.msra.mxu0 %v2128
    %2145 = vmatprep.subr.mxu0 0.0
    %2146 = vmatpush1.msra.mxu0 %v2129
    %2147 = vmatprep.subr.mxu0 0.0
    %2148 = vmatpush1.msra.mxu0 %v2130
    %2149 = vmatprep.subr.mxu0 0.0
    %2150 = vmatpush1.msra.mxu0 0.0
    %2151 = vmatprep.subr.mxu0 0.0
    %2152 = vmatpush1.msra.mxu0 0.0
    %2153 = vmatprep.subr.mxu0 0.0
    %2154 = vmatpush1.msra.mxu0 0.0
    %2155 = vmatprep.subr.mxu0 0.0
    %2156 = vmatpush1.msra.mxu0 0.0
    %2157 = vmatprep.subr.mxu0 0.0
    %2158 = vmatpush1.msra.mxu0 0.0
    %2159 = vmatprep.subr.mxu0 0.0
    %2160 = vmatpush1.msra.mxu0 0.0
    %2161 = vmatprep.subr.mxu0 0.0
    %2162 = vmatpush1.msra.mxu0 0.0
    %2163 = vmatprep.subr.mxu0 0.0
    %2164 = vmatpush1.msra.mxu0 0.0
    %2165 = vmatprep.subr.mxu0 0.0
    %2166 = vmatpush1.msra.mxu0 0.0
    %2167 = vmatprep.subr.mxu0 0.0
    %2168 = vmatpush1.msra.mxu0 0.0
    %2169 = vmatprep.subr.mxu0 0.0
    %2170 = vmatpush1.msra.mxu0 0.0
    %2171 = vmatprep.subr.mxu0 0.0
    %2172 = vmatpush1.msra.mxu0 0.0
    %2173 = vmatprep.subr.mxu0 0.0
    %2174 = vmatpush1.msra.mxu0 0.0
    %2175 = vmatprep.subr.mxu0 0.0
    %2176 = vmatpush1.msra.mxu0 0.0
    %2177 = vmatprep.subr.mxu0 0.0
    %2178 = vmatpush1.msra.mxu0 0.0
    %2179 = vmatprep.subr.mxu0 0.0
    %2180 = vmatpush1.msra.mxu0 0.0
    %2181 = vmatprep.subr.mxu0 0.0
    %2182 = vmatpush1.msra.mxu0 0.0
    %2183 = vmatprep.subr.mxu0 0.0
    %2184 = vmatpush1.msra.mxu0 0.0
    %2185 = vmatprep.subr.mxu0 0.0
    %2186 = vmatpush1.msra.mxu0 0.0
    %2187 = vmatprep.subr.mxu0 0.0
    %2188 = vmatpush1.msra.mxu0 0.0
    %2189 = vmatprep.subr.mxu0 0.0
    %2190 = vmatpush1.msra.mxu0 0.0
    %2191 = vmatprep.subr.mxu0 0.0
    %2192 = vmatpush1.msra.mxu0 0.0
    %2193 = vmatprep.subr.mxu0 0.0
    %2194 = vmatpush1.msra.mxu0 0.0
    %2195 = vmatprep.subr.mxu0 0.0
    %2196 = vmatpush1.msra.mxu0 0.0
    %2197 = vmatprep.subr.mxu0 0.0
    %2198 = vmatpush1.msra.mxu0 0.0
    %2199 = vmatprep.subr.mxu0 0.0
    %2200 = vmatpush1.msra.mxu0 0.0
    %2201 = vmatprep.subr.mxu0 0.0
    %2202 = vmatpush1.msra.mxu0 0.0
    %2203 = vmatprep.subr.mxu0 0.0
    %2204 = vmatpush1.msra.mxu0 0.0
    %2205 = vmatprep.mubr.f32.mxu0 0.0
    %2206 = vmatmul.mubr.f32.gmra.mrb[0].mxu0 %v2139
    %v2207 = vpop.f32.mrb[0].mxu0
    %v2208 = vadd.f32 %v2136, %v2207
    %v2209 = vpop.f32.mrb[0].mxu0
    %2210 = vdwg.mxu0
    %v2211 = vmax.f32 %v2208, 0.0
    %v2212 = vld [vmem:[%s11] sm:$0xff]
    %v2213 = vld [vmem:[%s11 + $0x8] sm:$0xff]
    %v2214 = vld [vmem:[#allocation2] sm:$0x1]
    %v2216 = vlaneseq
    %v2217 = vshrl.u32 %v2216, 7
    %v2218 = vsub.s32 0, %v2217
    %v2219 = vrot.slane %v2214, %v2218
    %v2222 = vsel %vm130, %v2211, 0
    %2224 = vmatprep.subr.mxu0 0.0
    %2225 = vmatpush1.msra.mxu0 %v2212
    %2226 = vmatprep.subr.mxu0 0.0
    %2227 = vmatpush1.msra.mxu0 %v2213
    %2228 = vmatprep.subr.mxu0 0.0
    %2229 = vmatpush1.msra.mxu0 0.0
    %2230 = vmatprep.subr.mxu0 0.0
    %2231 = vmatpush1.msra.mxu0 0.0
    %2232 = vmatprep.subr.mxu0 0.0
    %2233 = vmatpush1.msra.mxu0 0.0
    %2234 = vmatprep.subr.mxu0 0.0
    %2235 = vmatpush1.msra.mxu0 0.0
    %2236 = vmatprep.subr.mxu0 0.0
    %2237 = vmatpush1.msra.mxu0 0.0
    %2238 = vmatprep.subr.mxu0 0.0
    %2239 = vmatpush1.msra.mxu0 0.0
    %2240 = vmatprep.subr.mxu0 0.0
    %2241 = vmatpush1.msra.mxu0 0.0
    %2242 = vmatprep.subr.mxu0 0.0
    %2243 = vmatpush1.msra.mxu0 0.0
    %2244 = vmatprep.subr.mxu0 0.0
    %2245 = vmatpush1.msra.mxu0 0.0
    %2246 = vmatprep.subr.mxu0 0.0
    %2247 = vmatpush1.msra.mxu0 0.0
    %2248 = vmatprep.subr.mxu0 0.0
    %2249 = vmatpush1.msra.mxu0 0.0
    %2250 = vmatprep.subr.mxu0 0.0
    %2251 = vmatpush1.msra.mxu0 0.0
    %2252 = vmatprep.subr.mxu0 0.0
    %2253 = vmatpush1.msra.mxu0 0.0
    %2254 = vmatprep.subr.mxu0 0.0
    %2255 = vmatpush1.msra.mxu0 0.0
    %2256 = vmatprep.subr.mxu0 0.0
    %2257 = vmatpush1.msra.mxu0 0.0
    %2258 = vmatprep.subr.mxu0 0.0
    %2259 = vmatpush1.msra.mxu0 0.0
    %2260 = vmatprep.subr.mxu0 0.0
    %2261 = vmatpush1.msra.mxu0 0.0
    %2262 = vmatprep.subr.mxu0 0.0
    %2263 = vmatpush1.msra.mxu0 0.0
    %2264 = vmatprep.subr.mxu0 0.0
    %2265 = vmatpush1.msra.mxu0 0.0
    %2266 = vmatprep.subr.mxu0 0.0
    %2267 = vmatpush1.msra.mxu0 0.0
    %2268 = vmatprep.subr.mxu0 0.0
    %2269 = vmatpush1.msra.mxu0 0.0
    %2270 = vmatprep.subr.mxu0 0.0
    %2271 = vmatpush1.msra.mxu0 0.0
    %2272 = vmatprep.subr.mxu0 0.0
    %2273 = vmatpush1.msra.mxu0 0.0
    %2274 = vmatprep.subr.mxu0 0.0
    %2275 = vmatpush1.msra.mxu0 0.0
    %2276 = vmatprep.subr.mxu0 0.0
    %2277 = vmatpush1.msra.mxu0 0.0
    %2278 = vmatprep.subr.mxu0 0.0
    %2279 = vmatpush1.msra.mxu0 0.0
    %2280 = vmatprep.subr.mxu0 0.0
    %2281 = vmatpush1.msra.mxu0 0.0
    %2282 = vmatprep.subr.mxu0 0.0
    %2283 = vmatpush1.msra.mxu0 0.0
    %2284 = vmatprep.subr.mxu0 0.0
    %2285 = vmatpush1.msra.mxu0 0.0
    %2286 = vmatprep.subr.mxu0 0.0
    %2287 = vmatpush1.msra.mxu0 0.0
    %2288 = vmatprep.mubr.f32.mxu0 0.0
    %2289 = vmatmul.mubr.f32.gmra.mrb[0].mxu0 %v2222
    %v2290 = vpop.f32.mrb[0].mxu0
    %v2291 = vadd.f32 %v2219, %v2290
    %v2292 = vpop.f32.mrb[0].mxu0
    %2293 = vdwg.mxu0
    %vm2294 = vcmask 1024
    %2295 = vst.msk [vmem:[%s13] sm:$0x3] %vm2294, %v2291
    // Predicated region
    $region74: #{tpu_custom_call.1} parent=1 // pred_check
      _
    $region75: #{tpu_custom_call.1} parent=1 // pred_check_branch
      %2297 = sbr.rel (0) target = $region77
    $region76: #{tpu_custom_call.1} parent=1 // pred_region
      _
    $region77: #{tpu_custom_call.1} parent=1 // pred_fallthru
      _
    // Predicated region
    $region78: #{tpu_custom_call.1} parent=1 // pred_check
      _
    $region79: #{tpu_custom_call.1} parent=1 // pred_check_branch
      %2299 = sbr.rel (0) target = $region81
    $region80: #{tpu_custom_call.1} parent=1 // pred_region
      %s2301 = ssub.s32 64, 64
      %2302 = vsyncadd [#allocation5], %s2301
      %s2304 = sshll.u32 [#allocation12], 4
      %s2305 = int_to_ptr.vmem [resolvable:$true] %s2304
      %2307 = dma.vmem_to_hbm [thread:$0]  %s2305, 64, %s14, [#allocation5]
    $region81: #{tpu_custom_call.1} parent=1 // pred_fallthru
      _
    // Predicated region
    $region82: #{tpu_custom_call.1} parent=1 // pred_check
      _
    $region83: #{tpu_custom_call.1} parent=1 // pred_check_branch
      %2309 = sbr.rel (0) target = $region85
    $region84: #{tpu_custom_call.1} parent=1 // pred_region
      _
    $region85: #{tpu_custom_call.1} parent=1 // pred_fallthru
      _
    // Predicated region
    $region86: #{tpu_custom_call.1} parent=1 // pred_check
      _
    $region87: #{tpu_custom_call.1} parent=1 // pred_check_branch
      %2311 = sbr.rel (0) target = $region89
    $region88: #{tpu_custom_call.1} parent=1 // pred_region
      %2312 = dma.done [#allocation5], 64
    $region89: #{tpu_custom_call.1} parent=1 // pred_fallthru
      _
    %2313 = vsyncpa [#allocation4], 1
    %2314 = vsyncpa [#allocation7], 1
    %2315 = vsyncpa [#allocation10], 1
    %2316 = vsyncpa [#allocation5], 1

</llo_original>
